<compile_context>
chip_gen: v6e
topology: v6e:2x2x1
jax: 0.10.0
libtpu: 0.0.40
codegen_flags: <defaults>
</compile_context>

<pallas_src>
import math

import jax
import jax.numpy as jnp
from jax.experimental import pallas as pl
from jax.experimental.pallas import tpu as pltpu


def _layernorm(x, gamma, beta, eps=1e-5):
    mu = jnp.mean(x, axis=-1, keepdims=True)
    var = jnp.mean(jnp.square(x - mu), axis=-1, keepdims=True)
    return (x - mu) * jax.lax.rsqrt(var + eps) * gamma + beta


def make_fusion_kernel(num_heads, bt, seq_len, dim):
    H = num_heads
    Dh = dim // H
    R = bt * seq_len
    scale = 1.0 / math.sqrt(Dh)

    def kernel(u_ref, i_ref, wqkv_ref, bqkv_ref, wo_ref, w1_ref, bf1_ref,
               w2_ref, vec_ref, o_ref):
        u = u_ref[...].astype(jnp.float32)                  # (bt, S/2, D)
        it = i_ref[...].astype(jnp.float32)                 # (bt, S/2, D)
        x = jnp.concatenate([u, it], axis=1)                # (bt, S, D) tokens = [user|item]
        xf = x.reshape(R, dim)                              # (R, D) rows, batch-major

        vecs = vec_ref[...]                                 # (6, D)
        bo, g1, be1, bf2, g2, be2 = (vecs[j:j + 1, :] for j in range(6))

        # ---- multi-head self attention (fused QKV, fused output projection) ----
        qkv = jnp.dot(xf, wqkv_ref[...],
                      preferred_element_type=jnp.float32) + bqkv_ref[...]    # (R, 3D)
        head_outs = []
        for h in range(H):                                   # static unroll, tiny H
            q = qkv[:, h * Dh:(h + 1) * Dh].reshape(bt, seq_len, Dh)
            k = qkv[:, dim + h * Dh:dim + (h + 1) * Dh].reshape(bt, seq_len, Dh)
            v = qkv[:, 2 * dim + h * Dh:2 * dim + (h + 1) * Dh].reshape(bt, seq_len, Dh)
            s = jnp.einsum('bqd,bkd->bqk', q, k,
                           preferred_element_type=jnp.float32) * scale       # (bt,S,S)
            s = s - jnp.max(s, axis=-1, keepdims=True)
            p = jnp.exp(s)
            p = p * pl.reciprocal(jnp.sum(p, axis=-1, keepdims=True), approx=True)
            o_h = jnp.einsum('bqk,bkd->bqd', p, v,
                             preferred_element_type=jnp.float32)             # (bt,S,Dh)
            head_outs.append(o_h.reshape(R, Dh))
        attn = jnp.dot(jnp.concatenate(head_outs, axis=-1), wo_ref[...],
                       preferred_element_type=jnp.float32) + bo              # (R, D)

        # ---- post-norm encoder layer (PyTorch default norm_first=False) ----
        h1 = _layernorm(xf + attn, g1, be1)
        f = jnp.maximum(
            jnp.dot(h1, w1_ref[...], preferred_element_type=jnp.float32)
            + bf1_ref[...], 0.0)                                             # (R, ffn)
        f = jnp.dot(f, w2_ref[...], preferred_element_type=jnp.float32) + bf2
        h2 = _layernorm(h1 + f, g2, be2)

        # FusionLayer residual + lane-dense (bt, S*D) slab store (token t -> lanes t*D..).
        y = (xf + h2).reshape(bt, seq_len, dim)
        slab = jnp.concatenate([y[:, t, :] for t in range(seq_len)], axis=-1)
        o_ref[...] = slab.astype(o_ref.dtype)

    return kernel


def prepare_params(params):
    """Pre-transpose PyTorch-layout weights once, outside the kernel."""
    wqkv, bqkv, wo, bo, g1, be1, w1, bf1, w2, bf2, g2, be2 = params
    wqkv_t = wqkv.T                      # (D, 3D): output columns = [q | k | v]
    bqkv_r = bqkv.reshape(1, -1)         # (1, 3D)
    wo_t = wo.T                          # (D, D)
    w1_t = w1.T                          # (D, ffn)
    bf1_r = bf1.reshape(1, -1)           # (1, ffn)
    w2_t = w2.T                          # (ffn, D)
    vec6 = jnp.stack([bo, g1, be1, bf2, g2, be2], axis=0)   # (6, D)
    return [wqkv_t, bqkv_r, wo_t, w1_t, bf1_r, w2_t, vec6]


def _hw_caps():
    """(physical VMEM bytes, two TensorCores per chip?) with robust fallbacks."""
    vmem_phys = 128 << 20
    two_cores = False
    try:
        info = pltpu.get_tpu_info()
        vmem_phys = int(getattr(info, "vmem_capacity_bytes", vmem_phys))
    except Exception:
        pass
    try:
        kind = jax.devices()[0].device_kind.lower()
        two_cores = "v7" in kind
    except Exception:
        pass
    if vmem_phys <= (64 << 20):          # v7x-class part: smaller VMEM, 2 TCs/chip
        two_cores = True
    return vmem_phys, two_cores


def _choose_tiling(B, S, vmem_phys, two_cores):
    """Pick (bt, B_pad, n_steps).  Output block's 2nd-minor dim must be a multiple of 8
    or equal the (padded) batch, so multi-step tiles are rounded to multiples of 8."""
    max_rows = 2048 if vmem_phys <= (64 << 20) else 4096
    bt_cap = max(1, max_rows // S)
    min_steps = 2 if two_cores else 1
    if B <= bt_cap and (min_steps <= 1 or B <= 8):
        return B, B, 1                   # one step covers the whole batch
    bt = min(bt_cap, pl.cdiv(B, min_steps))
    bt = max(8, (bt // 8) * 8)
    n_steps = pl.cdiv(B, bt)
    return bt, n_steps * bt, n_steps


def fusion_layer(user_fea, item_fea, params, num_heads):
    """user_fea, item_fea: (B, S_half, D) float32 -> (B, 2*S_half*D)."""
    B, s_half, D = user_fea.shape
    S = 2 * s_half
    vmem_phys, two_cores = _hw_caps()
    bt, B_pad, n_steps = _choose_tiling(B, S, vmem_phys, two_cores)

    if B_pad != B:                       # pad awkward batch sizes; padded rows discarded
        pad = ((0, B_pad - B), (0, 0), (0, 0))
        user_fea = jnp.pad(user_fea, pad)
        item_fea = jnp.pad(item_fea, pad)

    kparams = prepare_params(params)
    kernel = make_fusion_kernel(num_heads, bt, S, D)

    def full_spec(a):
        return pl.BlockSpec(a.shape, lambda b, _nd=a.ndim: (0,) * _nd)

    weight_specs = [full_spec(p) for p in kparams]

    y = pl.pallas_call(
        kernel,
        out_shape=jax.ShapeDtypeStruct((B_pad, S * D), jnp.float32),
        grid_spec=pltpu.PrefetchScalarGridSpec(
            num_scalar_prefetch=0,
            grid=(n_steps,),
            in_specs=[pl.BlockSpec((bt, s_half, D), lambda b: (b, 0, 0)),
                      pl.BlockSpec((bt, s_half, D), lambda b: (b, 0, 0))]
                     + weight_specs,
            out_specs=pl.BlockSpec((bt, S * D), lambda b: (b, 0)),
        ),
        compiler_params=pltpu.CompilerParams(
            dimension_semantics=("parallel",),
            vmem_limit_bytes=int(vmem_phys * 3 // 4)),
    )(user_fea, item_fea, *kparams)

    return y[:B]                         # already lane-dense (B, S*D); no reshape needed


def init_params(key, dim, ffn_dim=128):
    """PyTorch-layout parameters of nn.TransformerEncoderLayer(dim, H, 128)."""
    ks = jax.random.split(key, 4)
    s = 0.02
    wqkv = s * jax.random.normal(ks[0], (3 * dim, dim), jnp.float32)
    bqkv = jnp.zeros((3 * dim,), jnp.float32)
    wo = s * jax.random.normal(ks[1], (dim, dim), jnp.float32)
    bo = jnp.zeros((dim,), jnp.float32)
    g1 = jnp.ones((dim,), jnp.float32)
    be1 = jnp.zeros((dim,), jnp.float32)
    w1 = s * jax.random.normal(ks[2], (ffn_dim, dim), jnp.float32)
    bf1 = jnp.zeros((ffn_dim,), jnp.float32)
    w2 = s * jax.random.normal(ks[3], (dim, ffn_dim), jnp.float32)
    bf2 = jnp.zeros((dim,), jnp.float32)
    g2 = jnp.ones((dim,), jnp.float32)
    be2 = jnp.zeros((dim,), jnp.float32)
    return [wqkv, bqkv, wo, bo, g1, be1, w1, bf1, w2, bf2, g2, be2]


def _reference(user_fea, item_fea, params, num_heads):
    """Pure-JAX FusionLayer forward (eval mode) for a correctness cross-check."""
    wqkv, bqkv, wo, bo, g1, be1, w1, bf1, w2, bf2, g2, be2 = params
    B, s_half, D = user_fea.shape
    H = num_heads
    Dh = D // H
    x = jnp.concatenate([user_fea, item_fea], axis=1)        # (B, S, D)
    S = x.shape[1]
    xf = x.reshape(B * S, D)
    qkv = xf @ wqkv.T + bqkv
    q, k, v = jnp.split(qkv, 3, axis=-1)
    heads = lambda t: t.reshape(B, S, H, Dh).transpose(0, 2, 1, 3)
    q, k, v = heads(q), heads(k), heads(v)
    sc = jnp.einsum('bhqd,bhkd->bhqk', q, k) / math.sqrt(Dh)
    p = jax.nn.softmax(sc, axis=-1)
    o = jnp.einsum('bhqk,bhkd->bhqd', p, v).transpose(0, 2, 1, 3).reshape(B * S, D)
    attn = o @ wo.T + bo

    def ln(t, g, b):
        mu = t.mean(-1, keepdims=True)
        var = ((t - mu) ** 2).mean(-1, keepdims=True)
        return (t - mu) / jnp.sqrt(var + 1e-5) * g + b

    h1 = ln(xf + attn, g1, be1)
    f = jnp.maximum(h1 @ w1.T + bf1, 0.0) @ w2.T + bf2
    h2 = ln(h1 + f, g2, be2)
    y = (xf + h2).reshape(B, S, D)
    u_out = y[:, :s_half].reshape(B, -1)
    i_out = y[:, s_half:].reshape(B, -1)
    return jnp.concatenate([u_out, i_out], axis=1)


if __name__ == "__main__":
    # config: id_emb_size=32, num_heads=4
    dim, num_heads = 32, 4
    B, s_half = 2, 4          # user/item each contribute 4 tokens -> S = 8

    key = jax.random.PRNGKey(0)
    k_u, k_i, k_p = jax.random.split(key, 3)
    user_fea = jax.random.normal(k_u, (B, s_half, dim), jnp.float32)
    item_fea = jax.random.normal(k_i, (B, s_half, dim), jnp.float32)
    params = init_params(k_p, dim)

    out = fusion_layer(user_fea, item_fea, params, num_heads)
    out = jax.block_until_ready(out)
    assert out.shape == (B, 2 * s_half * dim), out.shape

    ref = _reference(user_fea, item_fea, params, num_heads)
    # loose tolerance: softmax uses pl.reciprocal(approx=True)
    assert jnp.allclose(out, ref, atol=2e-2, rtol=2e-2), float(jnp.max(jnp.abs(out - ref)))
    print("KERNEL_OK")
</pallas_src>

<mosaic_0001>
module attributes {stable_mosaic.version = 11 : i64} {
  func.func @kernel(%arg0: i32, %arg1: memref<2x4x32xf32, #tpu.memory_space<vmem>>, %arg2: memref<2x4x32xf32, #tpu.memory_space<vmem>>, %arg3: memref<32x96xf32, #tpu.memory_space<vmem>>, %arg4: memref<1x96xf32, #tpu.memory_space<vmem>>, %arg5: memref<32x32xf32, #tpu.memory_space<vmem>>, %arg6: memref<32x128xf32, #tpu.memory_space<vmem>>, %arg7: memref<1x128xf32, #tpu.memory_space<vmem>>, %arg8: memref<128x32xf32, #tpu.memory_space<vmem>>, %arg9: memref<6x32xf32, #tpu.memory_space<vmem>>, %arg10: memref<2x256xf32, #tpu.memory_space<vmem>>) attributes {dimension_semantics = [#tpu.dimension_semantics<parallel>], iteration_bounds = array<i64: 1>, scalar_prefetch = 0 : i64, scratch_operands = 0 : i64, tpu.core_type = #tpu.core_type<tc>, window_params = [{transform_indices = @transform_0, window_bounds = array<i64: 2, 4, 32>}, {transform_indices = @transform_1, window_bounds = array<i64: 2, 4, 32>}, {pipeline_mode = #tpu.pipeline_mode<synchronous>, transform_indices = @transform_2, window_bounds = array<i64: 32, 96>}, {pipeline_mode = #tpu.pipeline_mode<synchronous>, transform_indices = @transform_3, window_bounds = array<i64: 1, 96>}, {pipeline_mode = #tpu.pipeline_mode<synchronous>, transform_indices = @transform_4, window_bounds = array<i64: 32, 32>}, {pipeline_mode = #tpu.pipeline_mode<synchronous>, transform_indices = @transform_5, window_bounds = array<i64: 32, 128>}, {pipeline_mode = #tpu.pipeline_mode<synchronous>, transform_indices = @transform_6, window_bounds = array<i64: 1, 128>}, {pipeline_mode = #tpu.pipeline_mode<synchronous>, transform_indices = @transform_7, window_bounds = array<i64: 128, 32>}, {pipeline_mode = #tpu.pipeline_mode<synchronous>, transform_indices = @transform_8, window_bounds = array<i64: 6, 32>}, {transform_indices = @transform_9, window_bounds = array<i64: 2, 256>}]} {
    %c0 = arith.constant 0 : index
    %c0_0 = arith.constant 0 : index
    %c0_1 = arith.constant 0 : index
    %0 = vector.load %arg1[%c0, %c0_0, %c0_1] : memref<2x4x32xf32, #tpu.memory_space<vmem>>, vector<2x4x32xf32>
    %c0_2 = arith.constant 0 : index
    %c0_3 = arith.constant 0 : index
    %c0_4 = arith.constant 0 : index
    %1 = vector.load %arg2[%c0_2, %c0_3, %c0_4] : memref<2x4x32xf32, #tpu.memory_space<vmem>>, vector<2x4x32xf32>
    %2 = tpu.concatenate %0, %1 in 1 : vector<2x4x32xf32>, vector<2x4x32xf32> -> vector<2x8x32xf32>
    %3 = vector.shape_cast %2 : vector<2x8x32xf32> to vector<16x32xf32>
    %c0_5 = arith.constant 0 : index
    %c0_6 = arith.constant 0 : index
    %4 = vector.load %arg9[%c0_5, %c0_6] : memref<6x32xf32, #tpu.memory_space<vmem>>, vector<6x32xf32>
    %5 = vector.extract_strided_slice %4 {offsets = [0, 0], sizes = [1, 32], strides = [1, 1]} : vector<6x32xf32> to vector<1x32xf32>
    %6 = vector.extract_strided_slice %4 {offsets = [1, 0], sizes = [1, 32], strides = [1, 1]} : vector<6x32xf32> to vector<1x32xf32>
    %7 = vector.extract_strided_slice %4 {offsets = [2, 0], sizes = [1, 32], strides = [1, 1]} : vector<6x32xf32> to vector<1x32xf32>
    %8 = vector.extract_strided_slice %4 {offsets = [3, 0], sizes = [1, 32], strides = [1, 1]} : vector<6x32xf32> to vector<1x32xf32>
    %9 = vector.extract_strided_slice %4 {offsets = [4, 0], sizes = [1, 32], strides = [1, 1]} : vector<6x32xf32> to vector<1x32xf32>
    %10 = vector.extract_strided_slice %4 {offsets = [5, 0], sizes = [1, 32], strides = [1, 1]} : vector<6x32xf32> to vector<1x32xf32>
    %c0_7 = arith.constant 0 : index
    %c0_8 = arith.constant 0 : index
    %11 = vector.load %arg3[%c0_7, %c0_8] : memref<32x96xf32, #tpu.memory_space<vmem>>, vector<32x96xf32>
    %cst = arith.constant dense<0.000000e+00> : vector<16x96xf32>
    %12 = tpu.matmul %3, %11, %cst {dimension_numbers = #tpu.dot_dimension_numbers<[1], [0], [0], [1], [0, 0, 1, 1], [], []>} : vector<16x32xf32>, vector<32x96xf32>, vector<16x96xf32> -> vector<16x96xf32>
    %c0_9 = arith.constant 0 : index
    %c0_10 = arith.constant 0 : index
    %13 = vector.load %arg4[%c0_9, %c0_10] : memref<1x96xf32, #tpu.memory_space<vmem>>, vector<1x96xf32>
    %14 = vector.broadcast %13 : vector<1x96xf32> to vector<16x96xf32>
    %15 = arith.addf %12, %14 : vector<16x96xf32>
    %16 = vector.extract_strided_slice %15 {offsets = [0, 0], sizes = [16, 8], strides = [1, 1]} : vector<16x96xf32> to vector<16x8xf32>
    %17 = vector.shape_cast %16 : vector<16x8xf32> to vector<2x8x8xf32>
    %18 = vector.extract_strided_slice %15 {offsets = [0, 32], sizes = [16, 8], strides = [1, 1]} : vector<16x96xf32> to vector<16x8xf32>
    %19 = vector.shape_cast %18 : vector<16x8xf32> to vector<2x8x8xf32>
    %20 = vector.extract_strided_slice %15 {offsets = [0, 64], sizes = [16, 8], strides = [1, 1]} : vector<16x96xf32> to vector<16x8xf32>
    %21 = vector.shape_cast %20 : vector<16x8xf32> to vector<2x8x8xf32>
    "tpu.trace_start"() <{level = 10 : i32, message = "bqd,bkd->bqk"}> : () -> ()
    %cst_11 = arith.constant dense<0.000000e+00> : vector<2x8x8xf32>
    %22 = tpu.matmul %17, %19, %cst_11 {dimension_numbers = #tpu.dot_dimension_numbers<[2], [2], [1], [1], [0, 0, 0, 1, 1, 1], [0], [0]>} : vector<2x8x8xf32>, vector<2x8x8xf32>, vector<2x8x8xf32> -> vector<2x8x8xf32>
    "tpu.trace_stop"() : () -> ()
    %cst_12 = arith.constant 0.353553385 : f32
    %23 = vector.broadcast %cst_12 : f32 to vector<2x8x8xf32>
    %24 = arith.mulf %22, %23 : vector<2x8x8xf32>
    %cst_13 = arith.constant dense<0xFF800000> : vector<2x8xf32>
    %25 = vector.multi_reduction <maximumf>, %24, %cst_13 [2] : vector<2x8x8xf32> to vector<2x8xf32>
    %26 = vector.shape_cast %25 : vector<2x8xf32> to vector<2x8x1xf32>
    %27 = vector.broadcast %26 : vector<2x8x1xf32> to vector<2x8x8xf32>
    %28 = arith.subf %24, %27 : vector<2x8x8xf32>
    %29 = math.exp %28 : vector<2x8x8xf32>
    %cst_14 = arith.constant dense<0.000000e+00> : vector<2x8xf32>
    %30 = vector.multi_reduction <add>, %29, %cst_14 [2] : vector<2x8x8xf32> to vector<2x8xf32>
    %31 = vector.shape_cast %30 : vector<2x8xf32> to vector<2x8x1xf32>
    %32 = tpu.reciprocal %31 {approx = true} : vector<2x8x1xf32> -> vector<2x8x1xf32>
    %33 = vector.broadcast %32 : vector<2x8x1xf32> to vector<2x8x8xf32>
    %34 = arith.mulf %29, %33 : vector<2x8x8xf32>
    "tpu.trace_start"() <{level = 10 : i32, message = "bqk,bkd->bqd"}> : () -> ()
    %cst_15 = arith.constant dense<0.000000e+00> : vector<2x8x8xf32>
    %35 = tpu.matmul %34, %21, %cst_15 {dimension_numbers = #tpu.dot_dimension_numbers<[2], [1], [1], [2], [0, 0, 0, 1, 1, 2], [0], [0]>} : vector<2x8x8xf32>, vector<2x8x8xf32>, vector<2x8x8xf32> -> vector<2x8x8xf32>
    "tpu.trace_stop"() : () -> ()
    %36 = vector.shape_cast %35 : vector<2x8x8xf32> to vector<16x8xf32>
    %37 = vector.extract_strided_slice %15 {offsets = [0, 8], sizes = [16, 8], strides = [1, 1]} : vector<16x96xf32> to vector<16x8xf32>
    %38 = vector.shape_cast %37 : vector<16x8xf32> to vector<2x8x8xf32>
    %39 = vector.extract_strided_slice %15 {offsets = [0, 40], sizes = [16, 8], strides = [1, 1]} : vector<16x96xf32> to vector<16x8xf32>
    %40 = vector.shape_cast %39 : vector<16x8xf32> to vector<2x8x8xf32>
    %41 = vector.extract_strided_slice %15 {offsets = [0, 72], sizes = [16, 8], strides = [1, 1]} : vector<16x96xf32> to vector<16x8xf32>
    %42 = vector.shape_cast %41 : vector<16x8xf32> to vector<2x8x8xf32>
    "tpu.trace_start"() <{level = 10 : i32, message = "bqd,bkd->bqk"}> : () -> ()
    %cst_16 = arith.constant dense<0.000000e+00> : vector<2x8x8xf32>
    %43 = tpu.matmul %38, %40, %cst_16 {dimension_numbers = #tpu.dot_dimension_numbers<[2], [2], [1], [1], [0, 0, 0, 1, 1, 1], [0], [0]>} : vector<2x8x8xf32>, vector<2x8x8xf32>, vector<2x8x8xf32> -> vector<2x8x8xf32>
    "tpu.trace_stop"() : () -> ()
    %cst_17 = arith.constant 0.353553385 : f32
    %44 = vector.broadcast %cst_17 : f32 to vector<2x8x8xf32>
    %45 = arith.mulf %43, %44 : vector<2x8x8xf32>
    %cst_18 = arith.constant dense<0xFF800000> : vector<2x8xf32>
    %46 = vector.multi_reduction <maximumf>, %45, %cst_18 [2] : vector<2x8x8xf32> to vector<2x8xf32>
    %47 = vector.shape_cast %46 : vector<2x8xf32> to vector<2x8x1xf32>
    %48 = vector.broadcast %47 : vector<2x8x1xf32> to vector<2x8x8xf32>
    %49 = arith.subf %45, %48 : vector<2x8x8xf32>
    %50 = math.exp %49 : vector<2x8x8xf32>
    %cst_19 = arith.constant dense<0.000000e+00> : vector<2x8xf32>
    %51 = vector.multi_reduction <add>, %50, %cst_19 [2] : vector<2x8x8xf32> to vector<2x8xf32>
    %52 = vector.shape_cast %51 : vector<2x8xf32> to vector<2x8x1xf32>
    %53 = tpu.reciprocal %52 {approx = true} : vector<2x8x1xf32> -> vector<2x8x1xf32>
    %54 = vector.broadcast %53 : vector<2x8x1xf32> to vector<2x8x8xf32>
    %55 = arith.mulf %50, %54 : vector<2x8x8xf32>
    "tpu.trace_start"() <{level = 10 : i32, message = "bqk,bkd->bqd"}> : () -> ()
    %cst_20 = arith.constant dense<0.000000e+00> : vector<2x8x8xf32>
    %56 = tpu.matmul %55, %42, %cst_20 {dimension_numbers = #tpu.dot_dimension_numbers<[2], [1], [1], [2], [0, 0, 0, 1, 1, 2], [0], [0]>} : vector<2x8x8xf32>, vector<2x8x8xf32>, vector<2x8x8xf32> -> vector<2x8x8xf32>
    "tpu.trace_stop"() : () -> ()
    %57 = vector.shape_cast %56 : vector<2x8x8xf32> to vector<16x8xf32>
    %58 = vector.extract_strided_slice %15 {offsets = [0, 16], sizes = [16, 8], strides = [1, 1]} : vector<16x96xf32> to vector<16x8xf32>
    %59 = vector.shape_cast %58 : vector<16x8xf32> to vector<2x8x8xf32>
    %60 = vector.extract_strided_slice %15 {offsets = [0, 48], sizes = [16, 8], strides = [1, 1]} : vector<16x96xf32> to vector<16x8xf32>
    %61 = vector.shape_cast %60 : vector<16x8xf32> to vector<2x8x8xf32>
    %62 = vector.extract_strided_slice %15 {offsets = [0, 80], sizes = [16, 8], strides = [1, 1]} : vector<16x96xf32> to vector<16x8xf32>
    %63 = vector.shape_cast %62 : vector<16x8xf32> to vector<2x8x8xf32>
    "tpu.trace_start"() <{level = 10 : i32, message = "bqd,bkd->bqk"}> : () -> ()
    %cst_21 = arith.constant dense<0.000000e+00> : vector<2x8x8xf32>
    %64 = tpu.matmul %59, %61, %cst_21 {dimension_numbers = #tpu.dot_dimension_numbers<[2], [2], [1], [1], [0, 0, 0, 1, 1, 1], [0], [0]>} : vector<2x8x8xf32>, vector<2x8x8xf32>, vector<2x8x8xf32> -> vector<2x8x8xf32>
    "tpu.trace_stop"() : () -> ()
    %cst_22 = arith.constant 0.353553385 : f32
    %65 = vector.broadcast %cst_22 : f32 to vector<2x8x8xf32>
    %66 = arith.mulf %64, %65 : vector<2x8x8xf32>
    %cst_23 = arith.constant dense<0xFF800000> : vector<2x8xf32>
    %67 = vector.multi_reduction <maximumf>, %66, %cst_23 [2] : vector<2x8x8xf32> to vector<2x8xf32>
    %68 = vector.shape_cast %67 : vector<2x8xf32> to vector<2x8x1xf32>
    %69 = vector.broadcast %68 : vector<2x8x1xf32> to vector<2x8x8xf32>
    %70 = arith.subf %66, %69 : vector<2x8x8xf32>
    %71 = math.exp %70 : vector<2x8x8xf32>
    %cst_24 = arith.constant dense<0.000000e+00> : vector<2x8xf32>
    %72 = vector.multi_reduction <add>, %71, %cst_24 [2] : vector<2x8x8xf32> to vector<2x8xf32>
    %73 = vector.shape_cast %72 : vector<2x8xf32> to vector<2x8x1xf32>
    %74 = tpu.reciprocal %73 {approx = true} : vector<2x8x1xf32> -> vector<2x8x1xf32>
    %75 = vector.broadcast %74 : vector<2x8x1xf32> to vector<2x8x8xf32>
    %76 = arith.mulf %71, %75 : vector<2x8x8xf32>
    "tpu.trace_start"() <{level = 10 : i32, message = "bqk,bkd->bqd"}> : () -> ()
    %cst_25 = arith.constant dense<0.000000e+00> : vector<2x8x8xf32>
    %77 = tpu.matmul %76, %63, %cst_25 {dimension_numbers = #tpu.dot_dimension_numbers<[2], [1], [1], [2], [0, 0, 0, 1, 1, 2], [0], [0]>} : vector<2x8x8xf32>, vector<2x8x8xf32>, vector<2x8x8xf32> -> vector<2x8x8xf32>
    "tpu.trace_stop"() : () -> ()
    %78 = vector.shape_cast %77 : vector<2x8x8xf32> to vector<16x8xf32>
    %79 = vector.extract_strided_slice %15 {offsets = [0, 24], sizes = [16, 8], strides = [1, 1]} : vector<16x96xf32> to vector<16x8xf32>
    %80 = vector.shape_cast %79 : vector<16x8xf32> to vector<2x8x8xf32>
    %81 = vector.extract_strided_slice %15 {offsets = [0, 56], sizes = [16, 8], strides = [1, 1]} : vector<16x96xf32> to vector<16x8xf32>
    %82 = vector.shape_cast %81 : vector<16x8xf32> to vector<2x8x8xf32>
    %83 = vector.extract_strided_slice %15 {offsets = [0, 88], sizes = [16, 8], strides = [1, 1]} : vector<16x96xf32> to vector<16x8xf32>
    %84 = vector.shape_cast %83 : vector<16x8xf32> to vector<2x8x8xf32>
    "tpu.trace_start"() <{level = 10 : i32, message = "bqd,bkd->bqk"}> : () -> ()
    %cst_26 = arith.constant dense<0.000000e+00> : vector<2x8x8xf32>
    %85 = tpu.matmul %80, %82, %cst_26 {dimension_numbers = #tpu.dot_dimension_numbers<[2], [2], [1], [1], [0, 0, 0, 1, 1, 1], [0], [0]>} : vector<2x8x8xf32>, vector<2x8x8xf32>, vector<2x8x8xf32> -> vector<2x8x8xf32>
    "tpu.trace_stop"() : () -> ()
    %cst_27 = arith.constant 0.353553385 : f32
    %86 = vector.broadcast %cst_27 : f32 to vector<2x8x8xf32>
    %87 = arith.mulf %85, %86 : vector<2x8x8xf32>
    %cst_28 = arith.constant dense<0xFF800000> : vector<2x8xf32>
    %88 = vector.multi_reduction <maximumf>, %87, %cst_28 [2] : vector<2x8x8xf32> to vector<2x8xf32>
    %89 = vector.shape_cast %88 : vector<2x8xf32> to vector<2x8x1xf32>
    %90 = vector.broadcast %89 : vector<2x8x1xf32> to vector<2x8x8xf32>
    %91 = arith.subf %87, %90 : vector<2x8x8xf32>
    %92 = math.exp %91 : vector<2x8x8xf32>
    %cst_29 = arith.constant dense<0.000000e+00> : vector<2x8xf32>
    %93 = vector.multi_reduction <add>, %92, %cst_29 [2] : vector<2x8x8xf32> to vector<2x8xf32>
    %94 = vector.shape_cast %93 : vector<2x8xf32> to vector<2x8x1xf32>
    %95 = tpu.reciprocal %94 {approx = true} : vector<2x8x1xf32> -> vector<2x8x1xf32>
    %96 = vector.broadcast %95 : vector<2x8x1xf32> to vector<2x8x8xf32>
    %97 = arith.mulf %92, %96 : vector<2x8x8xf32>
    "tpu.trace_start"() <{level = 10 : i32, message = "bqk,bkd->bqd"}> : () -> ()
    %cst_30 = arith.constant dense<0.000000e+00> : vector<2x8x8xf32>
    %98 = tpu.matmul %97, %84, %cst_30 {dimension_numbers = #tpu.dot_dimension_numbers<[2], [1], [1], [2], [0, 0, 0, 1, 1, 2], [0], [0]>} : vector<2x8x8xf32>, vector<2x8x8xf32>, vector<2x8x8xf32> -> vector<2x8x8xf32>
    "tpu.trace_stop"() : () -> ()
    %99 = vector.shape_cast %98 : vector<2x8x8xf32> to vector<16x8xf32>
    %100 = tpu.concatenate %36, %57, %78, %99 in 1 : vector<16x8xf32>, vector<16x8xf32>, vector<16x8xf32>, vector<16x8xf32> -> vector<16x32xf32>
    %c0_31 = arith.constant 0 : index
    %c0_32 = arith.constant 0 : index
    %101 = vector.load %arg5[%c0_31, %c0_32] : memref<32x32xf32, #tpu.memory_space<vmem>>, vector<32x32xf32>
    %cst_33 = arith.constant dense<0.000000e+00> : vector<16x32xf32>
    %102 = tpu.matmul %100, %101, %cst_33 {dimension_numbers = #tpu.dot_dimension_numbers<[1], [0], [0], [1], [0, 0, 1, 1], [], []>} : vector<16x32xf32>, vector<32x32xf32>, vector<16x32xf32> -> vector<16x32xf32>
    %103 = vector.broadcast %5 : vector<1x32xf32> to vector<16x32xf32>
    %104 = arith.addf %102, %103 : vector<16x32xf32>
    %105 = arith.addf %3, %104 : vector<16x32xf32>
    %cst_34 = arith.constant dense<0.000000e+00> : vector<16xf32>
    %106 = vector.multi_reduction <add>, %105, %cst_34 [1] : vector<16x32xf32> to vector<16xf32>
    %107 = vector.shape_cast %106 : vector<16xf32> to vector<16x1xf32>
    %cst_35 = arith.constant 3.200000e+01 : f32
    %108 = vector.broadcast %cst_35 : f32 to vector<16x1xf32>
    %109 = arith.divf %107, %108 : vector<16x1xf32>
    %110 = vector.broadcast %109 : vector<16x1xf32> to vector<16x32xf32>
    %111 = arith.subf %105, %110 : vector<16x32xf32>
    %112 = arith.mulf %111, %111 : vector<16x32xf32>
    %cst_36 = arith.constant dense<0.000000e+00> : vector<16xf32>
    %113 = vector.multi_reduction <add>, %112, %cst_36 [1] : vector<16x32xf32> to vector<16xf32>
    %114 = vector.shape_cast %113 : vector<16xf32> to vector<16x1xf32>
    %cst_37 = arith.constant 3.200000e+01 : f32
    %115 = vector.broadcast %cst_37 : f32 to vector<16x1xf32>
    %116 = arith.divf %114, %115 : vector<16x1xf32>
    %117 = vector.broadcast %109 : vector<16x1xf32> to vector<16x32xf32>
    %118 = arith.subf %105, %117 : vector<16x32xf32>
    %cst_38 = arith.constant 9.99999974E-6 : f32
    %119 = vector.broadcast %cst_38 : f32 to vector<16x1xf32>
    %120 = arith.addf %116, %119 : vector<16x1xf32>
    %121 = math.rsqrt %120 : vector<16x1xf32>
    %122 = vector.broadcast %121 : vector<16x1xf32> to vector<16x32xf32>
    %123 = arith.mulf %118, %122 : vector<16x32xf32>
    %124 = vector.broadcast %6 : vector<1x32xf32> to vector<16x32xf32>
    %125 = arith.mulf %123, %124 : vector<16x32xf32>
    %126 = vector.broadcast %7 : vector<1x32xf32> to vector<16x32xf32>
    %127 = arith.addf %125, %126 : vector<16x32xf32>
    %c0_39 = arith.constant 0 : index
    %c0_40 = arith.constant 0 : index
    %128 = vector.load %arg6[%c0_39, %c0_40] : memref<32x128xf32, #tpu.memory_space<vmem>>, vector<32x128xf32>
    %cst_41 = arith.constant dense<0.000000e+00> : vector<16x128xf32>
    %129 = tpu.matmul %127, %128, %cst_41 {dimension_numbers = #tpu.dot_dimension_numbers<[1], [0], [0], [1], [0, 0, 1, 1], [], []>} : vector<16x32xf32>, vector<32x128xf32>, vector<16x128xf32> -> vector<16x128xf32>
    %c0_42 = arith.constant 0 : index
    %c0_43 = arith.constant 0 : index
    %130 = vector.load %arg7[%c0_42, %c0_43] : memref<1x128xf32, #tpu.memory_space<vmem>>, vector<1x128xf32>
    %131 = vector.broadcast %130 : vector<1x128xf32> to vector<16x128xf32>
    %132 = arith.addf %129, %131 : vector<16x128xf32>
    %cst_44 = arith.constant 0.000000e+00 : f32
    %133 = vector.broadcast %cst_44 : f32 to vector<16x128xf32>
    %134 = arith.maximumf %132, %133 : vector<16x128xf32>
    %c0_45 = arith.constant 0 : index
    %c0_46 = arith.constant 0 : index
    %135 = vector.load %arg8[%c0_45, %c0_46] : memref<128x32xf32, #tpu.memory_space<vmem>>, vector<128x32xf32>
    %cst_47 = arith.constant dense<0.000000e+00> : vector<16x32xf32>
    %136 = tpu.matmul %134, %135, %cst_47 {dimension_numbers = #tpu.dot_dimension_numbers<[1], [0], [0], [1], [0, 0, 1, 1], [], []>} : vector<16x128xf32>, vector<128x32xf32>, vector<16x32xf32> -> vector<16x32xf32>
    %137 = vector.broadcast %8 : vector<1x32xf32> to vector<16x32xf32>
    %138 = arith.addf %136, %137 : vector<16x32xf32>
    %139 = arith.addf %127, %138 : vector<16x32xf32>
    %cst_48 = arith.constant dense<0.000000e+00> : vector<16xf32>
    %140 = vector.multi_reduction <add>, %139, %cst_48 [1] : vector<16x32xf32> to vector<16xf32>
    %141 = vector.shape_cast %140 : vector<16xf32> to vector<16x1xf32>
    %cst_49 = arith.constant 3.200000e+01 : f32
    %142 = vector.broadcast %cst_49 : f32 to vector<16x1xf32>
    %143 = arith.divf %141, %142 : vector<16x1xf32>
    %144 = vector.broadcast %143 : vector<16x1xf32> to vector<16x32xf32>
    %145 = arith.subf %139, %144 : vector<16x32xf32>
    %146 = arith.mulf %145, %145 : vector<16x32xf32>
    %cst_50 = arith.constant dense<0.000000e+00> : vector<16xf32>
    %147 = vector.multi_reduction <add>, %146, %cst_50 [1] : vector<16x32xf32> to vector<16xf32>
    %148 = vector.shape_cast %147 : vector<16xf32> to vector<16x1xf32>
    %cst_51 = arith.constant 3.200000e+01 : f32
    %149 = vector.broadcast %cst_51 : f32 to vector<16x1xf32>
    %150 = arith.divf %148, %149 : vector<16x1xf32>
    %151 = vector.broadcast %143 : vector<16x1xf32> to vector<16x32xf32>
    %152 = arith.subf %139, %151 : vector<16x32xf32>
    %cst_52 = arith.constant 9.99999974E-6 : f32
    %153 = vector.broadcast %cst_52 : f32 to vector<16x1xf32>
    %154 = arith.addf %150, %153 : vector<16x1xf32>
    %155 = math.rsqrt %154 : vector<16x1xf32>
    %156 = vector.broadcast %155 : vector<16x1xf32> to vector<16x32xf32>
    %157 = arith.mulf %152, %156 : vector<16x32xf32>
    %158 = vector.broadcast %9 : vector<1x32xf32> to vector<16x32xf32>
    %159 = arith.mulf %157, %158 : vector<16x32xf32>
    %160 = vector.broadcast %10 : vector<1x32xf32> to vector<16x32xf32>
    %161 = arith.addf %159, %160 : vector<16x32xf32>
    %162 = arith.addf %3, %161 : vector<16x32xf32>
    %163 = vector.shape_cast %162 : vector<16x32xf32> to vector<2x8x32xf32>
    %164 = vector.extract_strided_slice %163 {offsets = [0, 0, 0], sizes = [2, 1, 32], strides = [1, 1, 1]} : vector<2x8x32xf32> to vector<2x1x32xf32>
    %165 = vector.shape_cast %164 : vector<2x1x32xf32> to vector<2x32xf32>
    %166 = vector.extract_strided_slice %163 {offsets = [0, 1, 0], sizes = [2, 1, 32], strides = [1, 1, 1]} : vector<2x8x32xf32> to vector<2x1x32xf32>
    %167 = vector.shape_cast %166 : vector<2x1x32xf32> to vector<2x32xf32>
    %168 = vector.extract_strided_slice %163 {offsets = [0, 2, 0], sizes = [2, 1, 32], strides = [1, 1, 1]} : vector<2x8x32xf32> to vector<2x1x32xf32>
    %169 = vector.shape_cast %168 : vector<2x1x32xf32> to vector<2x32xf32>
    %170 = vector.extract_strided_slice %163 {offsets = [0, 3, 0], sizes = [2, 1, 32], strides = [1, 1, 1]} : vector<2x8x32xf32> to vector<2x1x32xf32>
    %171 = vector.shape_cast %170 : vector<2x1x32xf32> to vector<2x32xf32>
    %172 = vector.extract_strided_slice %163 {offsets = [0, 4, 0], sizes = [2, 1, 32], strides = [1, 1, 1]} : vector<2x8x32xf32> to vector<2x1x32xf32>
    %173 = vector.shape_cast %172 : vector<2x1x32xf32> to vector<2x32xf32>
    %174 = vector.extract_strided_slice %163 {offsets = [0, 5, 0], sizes = [2, 1, 32], strides = [1, 1, 1]} : vector<2x8x32xf32> to vector<2x1x32xf32>
    %175 = vector.shape_cast %174 : vector<2x1x32xf32> to vector<2x32xf32>
    %176 = vector.extract_strided_slice %163 {offsets = [0, 6, 0], sizes = [2, 1, 32], strides = [1, 1, 1]} : vector<2x8x32xf32> to vector<2x1x32xf32>
    %177 = vector.shape_cast %176 : vector<2x1x32xf32> to vector<2x32xf32>
    %178 = vector.extract_strided_slice %163 {offsets = [0, 7, 0], sizes = [2, 1, 32], strides = [1, 1, 1]} : vector<2x8x32xf32> to vector<2x1x32xf32>
    %179 = vector.shape_cast %178 : vector<2x1x32xf32> to vector<2x32xf32>
    %180 = tpu.concatenate %165, %167, %169, %171, %173, %175, %177, %179 in 1 : vector<2x32xf32>, vector<2x32xf32>, vector<2x32xf32>, vector<2x32xf32>, vector<2x32xf32>, vector<2x32xf32>, vector<2x32xf32>, vector<2x32xf32> -> vector<2x256xf32>
    %c0_53 = arith.constant 0 : index
    %c0_54 = arith.constant 0 : index
    %181 = vector.load %arg10[%c0_53, %c0_54] : memref<2x256xf32, #tpu.memory_space<vmem>>, vector<2x256xf32>
    tpu.vector_store %arg10[%c0_53, %c0_54], %180 {strides = array<i32>} : memref<2x256xf32, #tpu.memory_space<vmem>>, vector<2x256xf32>,
    return
  }
  func.func @transform_0(%arg0: i32) -> (i32, i32, i32) {
    %c0_i32 = arith.constant 0 : i32
    %c0_i32_0 = arith.constant 0 : i32
    %c0_i32_1 = arith.constant 0 : i32
    return %arg0, %c0_i32, %c0_i32_0 : i32, i32, i32
  }
  func.func @transform_1(%arg0: i32) -> (i32, i32, i32) {
    %c0_i32 = arith.constant 0 : i32
    %c0_i32_0 = arith.constant 0 : i32
    %c0_i32_1 = arith.constant 0 : i32
    return %arg0, %c0_i32, %c0_i32_0 : i32, i32, i32
  }
  func.func @transform_2(%arg0: i32) -> (i32, i32) {
    %c0_i32 = arith.constant 0 : i32
    %c0_i32_0 = arith.constant 0 : i32
    %c0_i32_1 = arith.constant 0 : i32
    return %c0_i32, %c0_i32_0 : i32, i32
  }
  func.func @transform_3(%arg0: i32) -> (i32, i32) {
    %c0_i32 = arith.constant 0 : i32
    %c0_i32_0 = arith.constant 0 : i32
    %c0_i32_1 = arith.constant 0 : i32
    return %c0_i32, %c0_i32_0 : i32, i32
  }
  func.func @transform_4(%arg0: i32) -> (i32, i32) {
    %c0_i32 = arith.constant 0 : i32
    %c0_i32_0 = arith.constant 0 : i32
    %c0_i32_1 = arith.constant 0 : i32
    return %c0_i32, %c0_i32_0 : i32, i32
  }
  func.func @transform_5(%arg0: i32) -> (i32, i32) {
    %c0_i32 = arith.constant 0 : i32
    %c0_i32_0 = arith.constant 0 : i32
    %c0_i32_1 = arith.constant 0 : i32
    return %c0_i32, %c0_i32_0 : i32, i32
  }
  func.func @transform_6(%arg0: i32) -> (i32, i32) {
    %c0_i32 = arith.constant 0 : i32
    %c0_i32_0 = arith.constant 0 : i32
    %c0_i32_1 = arith.constant 0 : i32
    return %c0_i32, %c0_i32_0 : i32, i32
  }
  func.func @transform_7(%arg0: i32) -> (i32, i32) {
    %c0_i32 = arith.constant 0 : i32
    %c0_i32_0 = arith.constant 0 : i32
    %c0_i32_1 = arith.constant 0 : i32
    return %c0_i32, %c0_i32_0 : i32, i32
  }
  func.func @transform_8(%arg0: i32) -> (i32, i32) {
    %c0_i32 = arith.constant 0 : i32
    %c0_i32_0 = arith.constant 0 : i32
    %c0_i32_1 = arith.constant 0 : i32
    return %c0_i32, %c0_i32_0 : i32, i32
  }
  func.func @transform_9(%arg0: i32) -> (i32, i32) {
    %c0_i32 = arith.constant 0 : i32
    %c0_i32_0 = arith.constant 0 : i32
    return %arg0, %c0_i32 : i32, i32
  }
}

</mosaic_0001>

<llo_original>
// kernel: tpu_custom_call.1
$region0: #{tpu_custom_call.1}
  #allocation0 [shape = 'u32[]', space=smem, size = 0x4, offset = 0x4, fixed_abs, tag = 'smem constant byte address 0x4 - core index']
  #allocation1 [shape = 'u32[144,128]{1,0:T(1,128)}', space=vmem, size = 0x12000, scoped, tag = 'internal scratch']
  %s0 = inlined_call_operand.vmem [shape: f32[2,4,32], index: 0, kind: input, shape index: {}]
  %s1 = inlined_call_operand.vmem [shape: f32[2,4,32], index: 1, kind: input, shape index: {}]
  %s2 = inlined_call_operand.vmem [shape: f32[32,96], index: 2, kind: input, shape index: {}]
  %s3 = inlined_call_operand.vmem [shape: f32[1,96], index: 3, kind: input, shape index: {}]
  %s4 = inlined_call_operand.vmem [shape: f32[32,32], index: 4, kind: input, shape index: {}]
  %s5 = inlined_call_operand.vmem [shape: f32[32,128], index: 5, kind: input, shape index: {}]
  %s6 = inlined_call_operand.vmem [shape: f32[1,128], index: 6, kind: input, shape index: {}]
  %s7 = inlined_call_operand.vmem [shape: f32[128,32], index: 7, kind: input, shape index: {}]
  %s8 = inlined_call_operand.vmem [shape: f32[6,32], index: 8, kind: input, shape index: {}]
  %s9 = inlined_call_operand.hbm [shape: f32[2,256], index: 9, kind: output, shape index: {}]
  %s10 = sld [smem:[#allocation0]]
  $region46: #{tpu_custom_call.1} parent=0
    _
  %s12 = ssub.s32 1, %s10
  %s13 = scalar_select 0, %s12, %s10
  $region1: #{tpu_custom_call.1} parent=0
    #allocation2 [shape = 'u8[2048]{0}', space=vmem, size = 0x800, scoped, tag = 'output window, operand 0, single buffered']
    #allocation3 [shape = 's32[1]{0}', space=sflag, size = 0x4, scoped, tag = 'scoped memory for tpu_custom_call.1']
    %14 = vsyncpa [#allocation3], 0
    // Predicated region
    $region2: #{tpu_custom_call.1} parent=1 // pred_check
      _
    $region3: #{tpu_custom_call.1} parent=1 // pred_check_branch
      %16 = sbr.rel (0) target = $region5
    $region4: #{tpu_custom_call.1} parent=1 // pred_region
      _
    $region5: #{tpu_custom_call.1} parent=1 // pred_fallthru
      _
    // Predicated region
    $region6: #{tpu_custom_call.1} parent=1 // pred_check
      _
    $region7: #{tpu_custom_call.1} parent=1 // pred_check_branch
      %18 = sbr.rel (0) target = $region9
    $region8: #{tpu_custom_call.1} parent=1 // pred_region
      _
    $region9: #{tpu_custom_call.1} parent=1 // pred_fallthru
      _
    // Predicated region
    $region10: #{tpu_custom_call.1} parent=1 // pred_check
      _
    $region11: #{tpu_custom_call.1} parent=1 // pred_check_branch
      %20 = sbr.rel (0) target = $region13
    $region12: #{tpu_custom_call.1} parent=1 // pred_region
      _
    $region13: #{tpu_custom_call.1} parent=1 // pred_fallthru
      _
    // Predicated region
    $region14: #{tpu_custom_call.1} parent=1 // pred_check
      _
    $region15: #{tpu_custom_call.1} parent=1 // pred_check_branch
      %22 = sbr.rel (0) target = $region17
    $region16: #{tpu_custom_call.1} parent=1 // pred_region
      _
    $region17: #{tpu_custom_call.1} parent=1 // pred_fallthru
      _
    // Predicated region
    $region18: #{tpu_custom_call.1} parent=1 // pred_check
      _
    $region19: #{tpu_custom_call.1} parent=1 // pred_check_branch
      %24 = sbr.rel (0) target = $region21
    $region20: #{tpu_custom_call.1} parent=1 // pred_region
      _
    $region21: #{tpu_custom_call.1} parent=1 // pred_fallthru
      _
    // Predicated region
    $region22: #{tpu_custom_call.1} parent=1 // pred_check
      _
    $region23: #{tpu_custom_call.1} parent=1 // pred_check_branch
      %26 = sbr.rel (0) target = $region25
    $region24: #{tpu_custom_call.1} parent=1 // pred_region
      _
    $region25: #{tpu_custom_call.1} parent=1 // pred_fallthru
      _
    // Predicated region
    $region26: #{tpu_custom_call.1} parent=1 // pred_check
      _
    $region27: #{tpu_custom_call.1} parent=1 // pred_check_branch
      %28 = sbr.rel (0) target = $region29
    $region28: #{tpu_custom_call.1} parent=1 // pred_region
      _
    $region29: #{tpu_custom_call.1} parent=1 // pred_fallthru
      _
    // Predicated region
    $region30: #{tpu_custom_call.1} parent=1 // pred_check
      _
    $region31: #{tpu_custom_call.1} parent=1 // pred_check_branch
      %30 = sbr.rel (0) target = $region33
    $region32: #{tpu_custom_call.1} parent=1 // pred_region
      _
    $region33: #{tpu_custom_call.1} parent=1 // pred_fallthru
      _
    // Predicated region
    $region34: #{tpu_custom_call.1} parent=1 // pred_check
      _
    $region35: #{tpu_custom_call.1} parent=1 // pred_check_branch
      %32 = sbr.rel (0) target = $region37
    $region36: #{tpu_custom_call.1} parent=1 // pred_region
      _
    $region37: #{tpu_custom_call.1} parent=1 // pred_fallthru
      _
    %v33 = vld [vmem:[%s0] sm:$0xf]
    %v34 = vld [vmem:[%s0 + $0x4] sm:$0xf]
    %v35 = vld [vmem:[%s1] sm:$0xf]
    %v36 = vld [vmem:[%s1 + $0x4] sm:$0xf]
    %v39 = vrot.slane %v35, 4
    %v40 = vrot.slane %v36, 4
    %vm43 = vcmask 1043456
    %v44 = vsel %vm43, %v33, %v39
    %v45 = vsel %vm43, %v34, %v40
    %v46 = vld [vmem:[%s8] sm:$0x3f]
    %v47 = vld [vmem:[%s2] sm:$0xff]
    %v48 = vld [vmem:[%s2 + $0x8] sm:$0xff]
    %v49 = vld [vmem:[%s2 + $0x10] sm:$0xff]
    %v50 = vld [vmem:[%s2 + $0x18] sm:$0xff]
    %v51 = vld [vmem:[%s3] sm:$0x1]
    %v53 = vlaneseq
    %v54 = vshrl.u32 %v53, 7
    %v55 = vsub.s32 0, %v54
    %v56 = vrot.slane %v51, %v55
    %vm58 = vcmask 261120
    %v60 = vsel %vm58, %v44, 0
    %v63 = vsel %vm58, %v45, 0
    %65 = vmatprep.subr.mxu0 0.0
    %66 = vmatpush1.msra.mxu0 0.0
    %67 = vmatprep.subr.mxu0 0.0
    %68 = vmatpush1.msra.mxu0 0.0
    %69 = vmatprep.subr.mxu0 0.0
    %70 = vmatpush1.msra.mxu0 0.0
    %71 = vmatprep.subr.mxu0 0.0
    %72 = vmatpush1.msra.mxu0 0.0
    %73 = vmatprep.subr.mxu0 0.0
    %74 = vmatpush1.msra.mxu0 0.0
    %75 = vmatprep.subr.mxu0 0.0
    %76 = vmatpush1.msra.mxu0 0.0
    %77 = vmatprep.subr.mxu0 0.0
    %78 = vmatpush1.msra.mxu0 0.0
    %79 = vmatprep.subr.mxu0 0.0
    %80 = vmatpush1.msra.mxu0 0.0
    %81 = vmatprep.subr.mxu0 0.0
    %82 = vmatpush1.msra.mxu0 0.0
    %83 = vmatprep.subr.mxu0 0.0
    %84 = vmatpush1.msra.mxu0 0.0
    %85 = vmatprep.subr.mxu0 0.0
    %86 = vmatpush1.msra.mxu0 0.0
    %87 = vmatprep.subr.mxu0 0.0
    %88 = vmatpush1.msra.mxu0 0.0
    %89 = vmatprep.subr.mxu0 0.0
    %90 = vmatpush1.msra.mxu0 %v50
    %91 = vmatprep.subr.mxu0 0.0
    %92 = vmatpush1.msra.mxu0 %v49
    %93 = vmatprep.subr.mxu0 0.0
    %94 = vmatpush1.msra.mxu0 %v48
    %95 = vmatprep.subr.mxu0 0.0
    %96 = vmatpush1.msra.mxu0 %v47
    %97 = vmatprep.subr.mxu0 0.0
    %98 = vmatpush2.msra.mxu0 0.0
    %99 = vmatprep.subr.mxu0 0.0
    %100 = vmatpush2.msra.mxu0 0.0
    %101 = vmatprep.subr.mxu0 0.0
    %102 = vmatpush2.msra.mxu0 0.0
    %103 = vmatprep.subr.mxu0 0.0
    %104 = vmatpush2.msra.mxu0 0.0
    %105 = vmatprep.subr.mxu0 0.0
    %106 = vmatpush2.msra.mxu0 0.0
    %107 = vmatprep.subr.mxu0 0.0
    %108 = vmatpush2.msra.mxu0 0.0
    %109 = vmatprep.subr.mxu0 0.0
    %110 = vmatpush2.msra.mxu0 0.0
    %111 = vmatprep.subr.mxu0 0.0
    %112 = vmatpush2.msra.mxu0 0.0
    %113 = vmatprep.subr.mxu0 0.0
    %114 = vmatpush2.msra.mxu0 0.0
    %115 = vmatprep.subr.mxu0 0.0
    %116 = vmatpush2.msra.mxu0 0.0
    %117 = vmatprep.subr.mxu0 0.0
    %118 = vmatpush2.msra.mxu0 0.0
    %119 = vmatprep.subr.mxu0 0.0
    %120 = vmatpush2.msra.mxu0 0.0
    %121 = vmatprep.subr.mxu0 0.0
    %122 = vmatpush2.msra.mxu0 0.0
    %123 = vmatprep.subr.mxu0 0.0
    %124 = vmatpush2.msra.mxu0 0.0
    %125 = vmatprep.subr.mxu0 0.0
    %126 = vmatpush2.msra.mxu0 0.0
    %127 = vmatprep.subr.mxu0 0.0
    %128 = vmatpush2.msra.mxu0 0.0
    %129 = vmatprep.mubr.f32.mxu0 0.0
    %130 = vmatmul.mubr.f32.gmra.mxu0 %v60
    %v131 = vpop.f32.mrf.mxu0
    %v132 = vadd.f32 %v56, %v131
    %v133 = vpop.f32.mrf.mxu0
    %134 = vmatprep.mubr.f32.mxu0 0.0
    %135 = vmatmul.mubr.f32.gmra.mxu0 %v63
    %v136 = vpop.f32.mrf.mxu0
    %v137 = vadd.f32 %v56, %v136
    %v138 = vpop.f32.mrf.mxu0
    %139 = vdwg.mxu0
    %141 = vrot.lane.b32.xlu0 %v132, 96
    %v142 = vpop.permute.xlu0 %141
    %vm143 = vcmask 64512
    %v144 = vsel %vm143, %v132, 0
    %v146 = vsel %vm143, %v142, 0
    %148 = vmatprep.subr.mxu0 0.0
    %149 = vmatpush1.xpose.msra.mxu0 0.0
    %150 = vmatprep.subr.mxu0 0.0
    %151 = vmatpush1.xpose.msra.mxu0 0.0
    %152 = vmatprep.subr.mxu0 0.0
    %153 = vmatpush1.xpose.msra.mxu0 0.0
    %154 = vmatprep.subr.mxu0 0.0
    %155 = vmatpush1.xpose.msra.mxu0 0.0
    %156 = vmatprep.subr.mxu0 0.0
    %157 = vmatpush1.xpose.msra.mxu0 0.0
    %158 = vmatprep.subr.mxu0 0.0
    %159 = vmatpush1.xpose.msra.mxu0 0.0
    %160 = vmatprep.subr.mxu0 0.0
    %161 = vmatpush1.xpose.msra.mxu0 0.0
    %162 = vmatprep.subr.mxu0 0.0
    %163 = vmatpush1.xpose.msra.mxu0 0.0
    %164 = vmatprep.subr.mxu0 0.0
    %165 = vmatpush1.xpose.msra.mxu0 0.0
    %166 = vmatprep.subr.mxu0 0.0
    %167 = vmatpush1.xpose.msra.mxu0 0.0
    %168 = vmatprep.subr.mxu0 0.0
    %169 = vmatpush1.xpose.msra.mxu0 0.0
    %170 = vmatprep.subr.mxu0 0.0
    %171 = vmatpush1.xpose.msra.mxu0 0.0
    %172 = vmatprep.subr.mxu0 0.0
    %173 = vmatpush1.xpose.msra.mxu0 0.0
    %174 = vmatprep.subr.mxu0 0.0
    %175 = vmatpush1.xpose.msra.mxu0 0.0
    %176 = vmatprep.subr.mxu0 0.0
    %177 = vmatpush1.xpose.msra.mxu0 0.0
    %178 = vmatprep.subr.mxu0 0.0
    %179 = vmatpush1.xpose.msra.mxu0 %v146
    %180 = vmatprep.subr.mxu0 0.0
    %181 = vmatpush2.xpose.msra.mxu0 0.0
    %182 = vmatprep.subr.mxu0 0.0
    %183 = vmatpush2.xpose.msra.mxu0 0.0
    %184 = vmatprep.subr.mxu0 0.0
    %185 = vmatpush2.xpose.msra.mxu0 0.0
    %186 = vmatprep.subr.mxu0 0.0
    %187 = vmatpush2.xpose.msra.mxu0 0.0
    %188 = vmatprep.subr.mxu0 0.0
    %189 = vmatpush2.xpose.msra.mxu0 0.0
    %190 = vmatprep.subr.mxu0 0.0
    %191 = vmatpush2.xpose.msra.mxu0 0.0
    %192 = vmatprep.subr.mxu0 0.0
    %193 = vmatpush2.xpose.msra.mxu0 0.0
    %194 = vmatprep.subr.mxu0 0.0
    %195 = vmatpush2.xpose.msra.mxu0 0.0
    %196 = vmatprep.subr.mxu0 0.0
    %197 = vmatpush2.xpose.msra.mxu0 0.0
    %198 = vmatprep.subr.mxu0 0.0
    %199 = vmatpush2.xpose.msra.mxu0 0.0
    %200 = vmatprep.subr.mxu0 0.0
    %201 = vmatpush2.xpose.msra.mxu0 0.0
    %202 = vmatprep.subr.mxu0 0.0
    %203 = vmatpush2.xpose.msra.mxu0 0.0
    %204 = vmatprep.subr.mxu0 0.0
    %205 = vmatpush2.xpose.msra.mxu0 0.0
    %206 = vmatprep.subr.mxu0 0.0
    %207 = vmatpush2.xpose.msra.mxu0 0.0
    %208 = vmatprep.subr.mxu0 0.0
    %209 = vmatpush2.xpose.msra.mxu0 0.0
    %210 = vmatprep.subr.mxu0 0.0
    %211 = vmatpush2.xpose.msra.mxu0 0.0
    %212 = vmatprep.mubr.f32.mxu0 0.0
    %213 = vmatmul.mubr.f32.gmra.mxu0 %v144
    %v214 = vpop.f32.mrf.mxu0
    %v215 = vadd.f32 0.0, %v214
    %v216 = vpop.f32.mrf.mxu0
    %217 = vdwg.mxu0
    %219 = vrot.lane.b32.xlu0 %v137, 96
    %v220 = vpop.permute.xlu0 %219
    %v221 = vsel %vm143, %v137, 0
    %v223 = vsel %vm143, %v220, 0
    %225 = vmatprep.subr.mxu0 0.0
    %226 = vmatpush1.xpose.msra.mxu0 0.0
    %227 = vmatprep.subr.mxu0 0.0
    %228 = vmatpush1.xpose.msra.mxu0 0.0
    %229 = vmatprep.subr.mxu0 0.0
    %230 = vmatpush1.xpose.msra.mxu0 0.0
    %231 = vmatprep.subr.mxu0 0.0
    %232 = vmatpush1.xpose.msra.mxu0 0.0
    %233 = vmatprep.subr.mxu0 0.0
    %234 = vmatpush1.xpose.msra.mxu0 0.0
    %235 = vmatprep.subr.mxu0 0.0
    %236 = vmatpush1.xpose.msra.mxu0 0.0
    %237 = vmatprep.subr.mxu0 0.0
    %238 = vmatpush1.xpose.msra.mxu0 0.0
    %239 = vmatprep.subr.mxu0 0.0
    %240 = vmatpush1.xpose.msra.mxu0 0.0
    %241 = vmatprep.subr.mxu0 0.0
    %242 = vmatpush1.xpose.msra.mxu0 0.0
    %243 = vmatprep.subr.mxu0 0.0
    %244 = vmatpush1.xpose.msra.mxu0 0.0
    %245 = vmatprep.subr.mxu0 0.0
    %246 = vmatpush1.xpose.msra.mxu0 0.0
    %247 = vmatprep.subr.mxu0 0.0
    %248 = vmatpush1.xpose.msra.mxu0 0.0
    %249 = vmatprep.subr.mxu0 0.0
    %250 = vmatpush1.xpose.msra.mxu0 0.0
    %251 = vmatprep.subr.mxu0 0.0
    %252 = vmatpush1.xpose.msra.mxu0 0.0
    %253 = vmatprep.subr.mxu0 0.0
    %254 = vmatpush1.xpose.msra.mxu0 0.0
    %255 = vmatprep.subr.mxu0 0.0
    %256 = vmatpush1.xpose.msra.mxu0 %v223
    %257 = vmatprep.subr.mxu0 0.0
    %258 = vmatpush2.xpose.msra.mxu0 0.0
    %259 = vmatprep.subr.mxu0 0.0
    %260 = vmatpush2.xpose.msra.mxu0 0.0
    %261 = vmatprep.subr.mxu0 0.0
    %262 = vmatpush2.xpose.msra.mxu0 0.0
    %263 = vmatprep.subr.mxu0 0.0
    %264 = vmatpush2.xpose.msra.mxu0 0.0
    %265 = vmatprep.subr.mxu0 0.0
    %266 = vmatpush2.xpose.msra.mxu0 0.0
    %267 = vmatprep.subr.mxu0 0.0
    %268 = vmatpush2.xpose.msra.mxu0 0.0
    %269 = vmatprep.subr.mxu0 0.0
    %270 = vmatpush2.xpose.msra.mxu0 0.0
    %271 = vmatprep.subr.mxu0 0.0
    %272 = vmatpush2.xpose.msra.mxu0 0.0
    %273 = vmatprep.subr.mxu0 0.0
    %274 = vmatpush2.xpose.msra.mxu0 0.0
    %275 = vmatprep.subr.mxu0 0.0
    %276 = vmatpush2.xpose.msra.mxu0 0.0
    %277 = vmatprep.subr.mxu0 0.0
    %278 = vmatpush2.xpose.msra.mxu0 0.0
    %279 = vmatprep.subr.mxu0 0.0
    %280 = vmatpush2.xpose.msra.mxu0 0.0
    %281 = vmatprep.subr.mxu0 0.0
    %282 = vmatpush2.xpose.msra.mxu0 0.0
    %283 = vmatprep.subr.mxu0 0.0
    %284 = vmatpush2.xpose.msra.mxu0 0.0
    %285 = vmatprep.subr.mxu0 0.0
    %286 = vmatpush2.xpose.msra.mxu0 0.0
    %287 = vmatprep.subr.mxu0 0.0
    %288 = vmatpush2.xpose.msra.mxu0 0.0
    %289 = vmatprep.mubr.f32.mxu0 0.0
    %290 = vmatmul.mubr.f32.gmra.mxu0 %v221
    %v291 = vpop.f32.mrf.mxu0
    %v292 = vadd.f32 0.0, %v291
    %v293 = vpop.f32.mrf.mxu0
    %294 = vdwg.mxu0
    %v295 = vmul.f32 %v215, 0.35355338
    %v296 = vmul.f32 %v292, 0.35355338
    %v297 = vsel %vm143, %v295, -inf
    %298 = vmax.xlane.f32.xlu0 %v297
    %v299 = vpop.xlane.xlu0 %298
    %v300 = vsel %vm143, %v296, -inf
    %301 = vmax.xlane.f32.xlu0 %v300
    %v302 = vpop.xlane.xlu0 %301
    %v303 = vsub.f32 %v295, %v299
    %v304 = vsub.f32 %v296, %v302
    %v305 = vmul.f32 %v303, 1.442695
    %v306 = vpow.pop %v305
    %v307 = vmul.f32 %v304, 1.442695
    %v308 = vpow.pop %v307
    %v309 = vsel %vm143, %v306, 0.0
    %310 = vadd.xlane.f32.xlu0 %v309
    %v311 = vpop.xlane.xlu0 %310
    %v312 = vsel %vm143, %v308, 0.0
    %313 = vadd.xlane.f32.xlu0 %v312
    %v314 = vpop.xlane.xlu0 %313
    %v315 = vrcp.pop %v311
    %v316 = vrcp.pop %v314
    %v317 = vmul.f32 %v306, %v315
    %v318 = vmul.f32 %v308, %v316
    %319 = vrot.lane.b32.xlu0 %v132, 64
    %v320 = vpop.permute.xlu0 %319
    %v323 = vsel %vm143, %v317, 0
    %325 = vmatprep.subr.mxu0 0.0
    %326 = vmatpush1.msra.mxu0 0.0
    %327 = vmatprep.subr.mxu0 0.0
    %328 = vmatpush1.msra.mxu0 0.0
    %329 = vmatprep.subr.mxu0 0.0
    %330 = vmatpush1.msra.mxu0 0.0
    %331 = vmatprep.subr.mxu0 0.0
    %332 = vmatpush1.msra.mxu0 0.0
    %333 = vmatprep.subr.mxu0 0.0
    %334 = vmatpush1.msra.mxu0 0.0
    %335 = vmatprep.subr.mxu0 0.0
    %336 = vmatpush1.msra.mxu0 0.0
    %337 = vmatprep.subr.mxu0 0.0
    %338 = vmatpush1.msra.mxu0 0.0
    %339 = vmatprep.subr.mxu0 0.0
    %340 = vmatpush1.msra.mxu0 0.0
    %341 = vmatprep.subr.mxu0 0.0
    %342 = vmatpush1.msra.mxu0 0.0
    %343 = vmatprep.subr.mxu0 0.0
    %344 = vmatpush1.msra.mxu0 0.0
    %345 = vmatprep.subr.mxu0 0.0
    %346 = vmatpush1.msra.mxu0 0.0
    %347 = vmatprep.subr.mxu0 0.0
    %348 = vmatpush1.msra.mxu0 0.0
    %349 = vmatprep.subr.mxu0 0.0
    %350 = vmatpush1.msra.mxu0 0.0
    %351 = vmatprep.subr.mxu0 0.0
    %352 = vmatpush1.msra.mxu0 0.0
    %353 = vmatprep.subr.mxu0 0.0
    %354 = vmatpush1.msra.mxu0 0.0
    %355 = vmatprep.subr.mxu0 0.0
    %356 = vmatpush1.msra.mxu0 %v320
    %357 = vmatprep.subr.mxu0 0.0
    %358 = vmatpush2.msra.mxu0 0.0
    %359 = vmatprep.subr.mxu0 0.0
    %360 = vmatpush2.msra.mxu0 0.0
    %361 = vmatprep.subr.mxu0 0.0
    %362 = vmatpush2.msra.mxu0 0.0
    %363 = vmatprep.subr.mxu0 0.0
    %364 = vmatpush2.msra.mxu0 0.0
    %365 = vmatprep.subr.mxu0 0.0
    %366 = vmatpush2.msra.mxu0 0.0
    %367 = vmatprep.subr.mxu0 0.0
    %368 = vmatpush2.msra.mxu0 0.0
    %369 = vmatprep.subr.mxu0 0.0
    %370 = vmatpush2.msra.mxu0 0.0
    %371 = vmatprep.subr.mxu0 0.0
    %372 = vmatpush2.msra.mxu0 0.0
    %373 = vmatprep.subr.mxu0 0.0
    %374 = vmatpush2.msra.mxu0 0.0
    %375 = vmatprep.subr.mxu0 0.0
    %376 = vmatpush2.msra.mxu0 0.0
    %377 = vmatprep.subr.mxu0 0.0
    %378 = vmatpush2.msra.mxu0 0.0
    %379 = vmatprep.subr.mxu0 0.0
    %380 = vmatpush2.msra.mxu0 0.0
    %381 = vmatprep.subr.mxu0 0.0
    %382 = vmatpush2.msra.mxu0 0.0
    %383 = vmatprep.subr.mxu0 0.0
    %384 = vmatpush2.msra.mxu0 0.0
    %385 = vmatprep.subr.mxu0 0.0
    %386 = vmatpush2.msra.mxu0 0.0
    %387 = vmatprep.subr.mxu0 0.0
    %388 = vmatpush2.msra.mxu0 0.0
    %389 = vmatprep.mubr.f32.mxu0 0.0
    %390 = vmatmul.mubr.f32.gmra.mxu0 %v323
    %v391 = vpop.f32.mrf.mxu0
    %v392 = vadd.f32 0.0, %v391
    %v393 = vpop.f32.mrf.mxu0
    %394 = vdwg.mxu0
    %395 = vrot.lane.b32.xlu0 %v137, 64
    %v396 = vpop.permute.xlu0 %395
    %v399 = vsel %vm143, %v318, 0
    %401 = vmatprep.subr.mxu0 0.0
    %402 = vmatpush1.msra.mxu0 0.0
    %403 = vmatprep.subr.mxu0 0.0
    %404 = vmatpush1.msra.mxu0 0.0
    %405 = vmatprep.subr.mxu0 0.0
    %406 = vmatpush1.msra.mxu0 0.0
    %407 = vmatprep.subr.mxu0 0.0
    %408 = vmatpush1.msra.mxu0 0.0
    %409 = vmatprep.subr.mxu0 0.0
    %410 = vmatpush1.msra.mxu0 0.0
    %411 = vmatprep.subr.mxu0 0.0
    %412 = vmatpush1.msra.mxu0 0.0
    %413 = vmatprep.subr.mxu0 0.0
    %414 = vmatpush1.msra.mxu0 0.0
    %415 = vmatprep.subr.mxu0 0.0
    %416 = vmatpush1.msra.mxu0 0.0
    %417 = vmatprep.subr.mxu0 0.0
    %418 = vmatpush1.msra.mxu0 0.0
    %419 = vmatprep.subr.mxu0 0.0
    %420 = vmatpush1.msra.mxu0 0.0
    %421 = vmatprep.subr.mxu0 0.0
    %422 = vmatpush1.msra.mxu0 0.0
    %423 = vmatprep.subr.mxu0 0.0
    %424 = vmatpush1.msra.mxu0 0.0
    %425 = vmatprep.subr.mxu0 0.0
    %426 = vmatpush1.msra.mxu0 0.0
    %427 = vmatprep.subr.mxu0 0.0
    %428 = vmatpush1.msra.mxu0 0.0
    %429 = vmatprep.subr.mxu0 0.0
    %430 = vmatpush1.msra.mxu0 0.0
    %431 = vmatprep.subr.mxu0 0.0
    %432 = vmatpush1.msra.mxu0 %v396
    %433 = vmatprep.subr.mxu0 0.0
    %434 = vmatpush2.msra.mxu0 0.0
    %435 = vmatprep.subr.mxu0 0.0
    %436 = vmatpush2.msra.mxu0 0.0
    %437 = vmatprep.subr.mxu0 0.0
    %438 = vmatpush2.msra.mxu0 0.0
    %439 = vmatprep.subr.mxu0 0.0
    %440 = vmatpush2.msra.mxu0 0.0
    %441 = vmatprep.subr.mxu0 0.0
    %442 = vmatpush2.msra.mxu0 0.0
    %443 = vmatprep.subr.mxu0 0.0
    %444 = vmatpush2.msra.mxu0 0.0
    %445 = vmatprep.subr.mxu0 0.0
    %446 = vmatpush2.msra.mxu0 0.0
    %447 = vmatprep.subr.mxu0 0.0
    %448 = vmatpush2.msra.mxu0 0.0
    %449 = vmatprep.subr.mxu0 0.0
    %450 = vmatpush2.msra.mxu0 0.0
    %451 = vmatprep.subr.mxu0 0.0
    %452 = vmatpush2.msra.mxu0 0.0
    %453 = vmatprep.subr.mxu0 0.0
    %454 = vmatpush2.msra.mxu0 0.0
    %455 = vmatprep.subr.mxu0 0.0
    %456 = vmatpush2.msra.mxu0 0.0
    %457 = vmatprep.subr.mxu0 0.0
    %458 = vmatpush2.msra.mxu0 0.0
    %459 = vmatprep.subr.mxu0 0.0
    %460 = vmatpush2.msra.mxu0 0.0
    %461 = vmatprep.subr.mxu0 0.0
    %462 = vmatpush2.msra.mxu0 0.0
    %463 = vmatprep.subr.mxu0 0.0
    %464 = vmatpush2.msra.mxu0 0.0
    %465 = vmatprep.mubr.f32.mxu0 0.0
    %466 = vmatmul.mubr.f32.gmra.mxu0 %v399
    %v467 = vpop.f32.mrf.mxu0
    %v468 = vadd.f32 0.0, %v467
    %v469 = vpop.f32.mrf.mxu0
    %470 = vdwg.mxu0
    %471 = vrot.lane.b32.xlu0 %v132, 120
    %v472 = vpop.permute.xlu0 %471
    %473 = vrot.lane.b32.xlu0 %v132, 88
    %v474 = vpop.permute.xlu0 %473
    %v475 = vsel %vm143, %v472, 0
    %v477 = vsel %vm143, %v474, 0
    %479 = vmatprep.subr.mxu0 0.0
    %480 = vmatpush1.xpose.msra.mxu0 0.0
    %481 = vmatprep.subr.mxu0 0.0
    %482 = vmatpush1.xpose.msra.mxu0 0.0
    %483 = vmatprep.subr.mxu0 0.0
    %484 = vmatpush1.xpose.msra.mxu0 0.0
    %485 = vmatprep.subr.mxu0 0.0
    %486 = vmatpush1.xpose.msra.mxu0 0.0
    %487 = vmatprep.subr.mxu0 0.0
    %488 = vmatpush1.xpose.msra.mxu0 0.0
    %489 = vmatprep.subr.mxu0 0.0
    %490 = vmatpush1.xpose.msra.mxu0 0.0
    %491 = vmatprep.subr.mxu0 0.0
    %492 = vmatpush1.xpose.msra.mxu0 0.0
    %493 = vmatprep.subr.mxu0 0.0
    %494 = vmatpush1.xpose.msra.mxu0 0.0
    %495 = vmatprep.subr.mxu0 0.0
    %496 = vmatpush1.xpose.msra.mxu0 0.0
    %497 = vmatprep.subr.mxu0 0.0
    %498 = vmatpush1.xpose.msra.mxu0 0.0
    %499 = vmatprep.subr.mxu0 0.0
    %500 = vmatpush1.xpose.msra.mxu0 0.0
    %501 = vmatprep.subr.mxu0 0.0
    %502 = vmatpush1.xpose.msra.mxu0 0.0
    %503 = vmatprep.subr.mxu0 0.0
    %504 = vmatpush1.xpose.msra.mxu0 0.0
    %505 = vmatprep.subr.mxu0 0.0
    %506 = vmatpush1.xpose.msra.mxu0 0.0
    %507 = vmatprep.subr.mxu0 0.0
    %508 = vmatpush1.xpose.msra.mxu0 0.0
    %509 = vmatprep.subr.mxu0 0.0
    %510 = vmatpush1.xpose.msra.mxu0 %v477
    %511 = vmatprep.subr.mxu0 0.0
    %512 = vmatpush2.xpose.msra.mxu0 0.0
    %513 = vmatprep.subr.mxu0 0.0
    %514 = vmatpush2.xpose.msra.mxu0 0.0
    %515 = vmatprep.subr.mxu0 0.0
    %516 = vmatpush2.xpose.msra.mxu0 0.0
    %517 = vmatprep.subr.mxu0 0.0
    %518 = vmatpush2.xpose.msra.mxu0 0.0
    %519 = vmatprep.subr.mxu0 0.0
    %520 = vmatpush2.xpose.msra.mxu0 0.0
    %521 = vmatprep.subr.mxu0 0.0
    %522 = vmatpush2.xpose.msra.mxu0 0.0
    %523 = vmatprep.subr.mxu0 0.0
    %524 = vmatpush2.xpose.msra.mxu0 0.0
    %525 = vmatprep.subr.mxu0 0.0
    %526 = vmatpush2.xpose.msra.mxu0 0.0
    %527 = vmatprep.subr.mxu0 0.0
    %528 = vmatpush2.xpose.msra.mxu0 0.0
    %529 = vmatprep.subr.mxu0 0.0
    %530 = vmatpush2.xpose.msra.mxu0 0.0
    %531 = vmatprep.subr.mxu0 0.0
    %532 = vmatpush2.xpose.msra.mxu0 0.0
    %533 = vmatprep.subr.mxu0 0.0
    %534 = vmatpush2.xpose.msra.mxu0 0.0
    %535 = vmatprep.subr.mxu0 0.0
    %536 = vmatpush2.xpose.msra.mxu0 0.0
    %537 = vmatprep.subr.mxu0 0.0
    %538 = vmatpush2.xpose.msra.mxu0 0.0
    %539 = vmatprep.subr.mxu0 0.0
    %540 = vmatpush2.xpose.msra.mxu0 0.0
    %541 = vmatprep.subr.mxu0 0.0
    %542 = vmatpush2.xpose.msra.mxu0 0.0
    %543 = vmatprep.mubr.f32.mxu0 0.0
    %544 = vmatmul.mubr.f32.gmra.mxu0 %v475
    %v545 = vpop.f32.mrf.mxu0
    %v546 = vadd.f32 0.0, %v545
    %v547 = vpop.f32.mrf.mxu0
    %548 = vdwg.mxu0
    %549 = vrot.lane.b32.xlu0 %v137, 120
    %v550 = vpop.permute.xlu0 %549
    %551 = vrot.lane.b32.xlu0 %v137, 88
    %v552 = vpop.permute.xlu0 %551
    %v553 = vsel %vm143, %v550, 0
    %v555 = vsel %vm143, %v552, 0
    %557 = vmatprep.subr.mxu0 0.0
    %558 = vmatpush1.xpose.msra.mxu0 0.0
    %559 = vmatprep.subr.mxu0 0.0
    %560 = vmatpush1.xpose.msra.mxu0 0.0
    %561 = vmatprep.subr.mxu0 0.0
    %562 = vmatpush1.xpose.msra.mxu0 0.0
    %563 = vmatprep.subr.mxu0 0.0
    %564 = vmatpush1.xpose.msra.mxu0 0.0
    %565 = vmatprep.subr.mxu0 0.0
    %566 = vmatpush1.xpose.msra.mxu0 0.0
    %567 = vmatprep.subr.mxu0 0.0
    %568 = vmatpush1.xpose.msra.mxu0 0.0
    %569 = vmatprep.subr.mxu0 0.0
    %570 = vmatpush1.xpose.msra.mxu0 0.0
    %571 = vmatprep.subr.mxu0 0.0
    %572 = vmatpush1.xpose.msra.mxu0 0.0
    %573 = vmatprep.subr.mxu0 0.0
    %574 = vmatpush1.xpose.msra.mxu0 0.0
    %575 = vmatprep.subr.mxu0 0.0
    %576 = vmatpush1.xpose.msra.mxu0 0.0
    %577 = vmatprep.subr.mxu0 0.0
    %578 = vmatpush1.xpose.msra.mxu0 0.0
    %579 = vmatprep.subr.mxu0 0.0
    %580 = vmatpush1.xpose.msra.mxu0 0.0
    %581 = vmatprep.subr.mxu0 0.0
    %582 = vmatpush1.xpose.msra.mxu0 0.0
    %583 = vmatprep.subr.mxu0 0.0
    %584 = vmatpush1.xpose.msra.mxu0 0.0
    %585 = vmatprep.subr.mxu0 0.0
    %586 = vmatpush1.xpose.msra.mxu0 0.0
    %587 = vmatprep.subr.mxu0 0.0
    %588 = vmatpush1.xpose.msra.mxu0 %v555
    %589 = vmatprep.subr.mxu0 0.0
    %590 = vmatpush2.xpose.msra.mxu0 0.0
    %591 = vmatprep.subr.mxu0 0.0
    %592 = vmatpush2.xpose.msra.mxu0 0.0
    %593 = vmatprep.subr.mxu0 0.0
    %594 = vmatpush2.xpose.msra.mxu0 0.0
    %595 = vmatprep.subr.mxu0 0.0
    %596 = vmatpush2.xpose.msra.mxu0 0.0
    %597 = vmatprep.subr.mxu0 0.0
    %598 = vmatpush2.xpose.msra.mxu0 0.0
    %599 = vmatprep.subr.mxu0 0.0
    %600 = vmatpush2.xpose.msra.mxu0 0.0
    %601 = vmatprep.subr.mxu0 0.0
    %602 = vmatpush2.xpose.msra.mxu0 0.0
    %603 = vmatprep.subr.mxu0 0.0
    %604 = vmatpush2.xpose.msra.mxu0 0.0
    %605 = vmatprep.subr.mxu0 0.0
    %606 = vmatpush2.xpose.msra.mxu0 0.0
    %607 = vmatprep.subr.mxu0 0.0
    %608 = vmatpush2.xpose.msra.mxu0 0.0
    %609 = vmatprep.subr.mxu0 0.0
    %610 = vmatpush2.xpose.msra.mxu0 0.0
    %611 = vmatprep.subr.mxu0 0.0
    %612 = vmatpush2.xpose.msra.mxu0 0.0
    %613 = vmatprep.subr.mxu0 0.0
    %614 = vmatpush2.xpose.msra.mxu0 0.0
    %615 = vmatprep.subr.mxu0 0.0
    %616 = vmatpush2.xpose.msra.mxu0 0.0
    %617 = vmatprep.subr.mxu0 0.0
    %618 = vmatpush2.xpose.msra.mxu0 0.0
    %619 = vmatprep.subr.mxu0 0.0
    %620 = vmatpush2.xpose.msra.mxu0 0.0
    %621 = vmatprep.mubr.f32.mxu0 0.0
    %622 = vmatmul.mubr.f32.gmra.mxu0 %v553
    %v623 = vpop.f32.mrf.mxu0
    %v624 = vadd.f32 0.0, %v623
    %v625 = vpop.f32.mrf.mxu0
    %626 = vdwg.mxu0
    %v627 = vmul.f32 %v546, 0.35355338
    %v628 = vmul.f32 %v624, 0.35355338
    %v629 = vsel %vm143, %v627, -inf
    %630 = vmax.xlane.f32.xlu0 %v629
    %v631 = vpop.xlane.xlu0 %630
    %v632 = vsel %vm143, %v628, -inf
    %633 = vmax.xlane.f32.xlu0 %v632
    %v634 = vpop.xlane.xlu0 %633
    %v635 = vsub.f32 %v627, %v631
    %v636 = vsub.f32 %v628, %v634
    %v637 = vmul.f32 %v635, 1.442695
    %v638 = vpow.pop %v637
    %v639 = vmul.f32 %v636, 1.442695
    %v640 = vpow.pop %v639
    %v641 = vsel %vm143, %v638, 0.0
    %642 = vadd.xlane.f32.xlu0 %v641
    %v643 = vpop.xlane.xlu0 %642
    %v644 = vsel %vm143, %v640, 0.0
    %645 = vadd.xlane.f32.xlu0 %v644
    %v646 = vpop.xlane.xlu0 %645
    %v647 = vrcp.pop %v643
    %v648 = vrcp.pop %v646
    %v649 = vmul.f32 %v638, %v647
    %v650 = vmul.f32 %v640, %v648
    %651 = vrot.lane.b32.xlu0 %v132, 56
    %v652 = vpop.permute.xlu0 %651
    %v655 = vsel %vm143, %v649, 0
    %657 = vmatprep.subr.mxu0 0.0
    %658 = vmatpush1.msra.mxu0 0.0
    %659 = vmatprep.subr.mxu0 0.0
    %660 = vmatpush1.msra.mxu0 0.0
    %661 = vmatprep.subr.mxu0 0.0
    %662 = vmatpush1.msra.mxu0 0.0
    %663 = vmatprep.subr.mxu0 0.0
    %664 = vmatpush1.msra.mxu0 0.0
    %665 = vmatprep.subr.mxu0 0.0
    %666 = vmatpush1.msra.mxu0 0.0
    %667 = vmatprep.subr.mxu0 0.0
    %668 = vmatpush1.msra.mxu0 0.0
    %669 = vmatprep.subr.mxu0 0.0
    %670 = vmatpush1.msra.mxu0 0.0
    %671 = vmatprep.subr.mxu0 0.0
    %672 = vmatpush1.msra.mxu0 0.0
    %673 = vmatprep.subr.mxu0 0.0
    %674 = vmatpush1.msra.mxu0 0.0
    %675 = vmatprep.subr.mxu0 0.0
    %676 = vmatpush1.msra.mxu0 0.0
    %677 = vmatprep.subr.mxu0 0.0
    %678 = vmatpush1.msra.mxu0 0.0
    %679 = vmatprep.subr.mxu0 0.0
    %680 = vmatpush1.msra.mxu0 0.0
    %681 = vmatprep.subr.mxu0 0.0
    %682 = vmatpush1.msra.mxu0 0.0
    %683 = vmatprep.subr.mxu0 0.0
    %684 = vmatpush1.msra.mxu0 0.0
    %685 = vmatprep.subr.mxu0 0.0
    %686 = vmatpush1.msra.mxu0 0.0
    %687 = vmatprep.subr.mxu0 0.0
    %688 = vmatpush1.msra.mxu0 %v652
    %689 = vmatprep.subr.mxu0 0.0
    %690 = vmatpush2.msra.mxu0 0.0
    %691 = vmatprep.subr.mxu0 0.0
    %692 = vmatpush2.msra.mxu0 0.0
    %693 = vmatprep.subr.mxu0 0.0
    %694 = vmatpush2.msra.mxu0 0.0
    %695 = vmatprep.subr.mxu0 0.0
    %696 = vmatpush2.msra.mxu0 0.0
    %697 = vmatprep.subr.mxu0 0.0
    %698 = vmatpush2.msra.mxu0 0.0
    %699 = vmatprep.subr.mxu0 0.0
    %700 = vmatpush2.msra.mxu0 0.0
    %701 = vmatprep.subr.mxu0 0.0
    %702 = vmatpush2.msra.mxu0 0.0
    %703 = vmatprep.subr.mxu0 0.0
    %704 = vmatpush2.msra.mxu0 0.0
    %705 = vmatprep.subr.mxu0 0.0
    %706 = vmatpush2.msra.mxu0 0.0
    %707 = vmatprep.subr.mxu0 0.0
    %708 = vmatpush2.msra.mxu0 0.0
    %709 = vmatprep.subr.mxu0 0.0
    %710 = vmatpush2.msra.mxu0 0.0
    %711 = vmatprep.subr.mxu0 0.0
    %712 = vmatpush2.msra.mxu0 0.0
    %713 = vmatprep.subr.mxu0 0.0
    %714 = vmatpush2.msra.mxu0 0.0
    %715 = vmatprep.subr.mxu0 0.0
    %716 = vmatpush2.msra.mxu0 0.0
    %717 = vmatprep.subr.mxu0 0.0
    %718 = vmatpush2.msra.mxu0 0.0
    %719 = vmatprep.subr.mxu0 0.0
    %720 = vmatpush2.msra.mxu0 0.0
    %721 = vmatprep.mubr.f32.mxu0 0.0
    %722 = vmatmul.mubr.f32.gmra.mxu0 %v655
    %v723 = vpop.f32.mrf.mxu0
    %v724 = vadd.f32 0.0, %v723
    %v725 = vpop.f32.mrf.mxu0
    %726 = vdwg.mxu0
    %727 = vrot.lane.b32.xlu0 %v137, 56
    %v728 = vpop.permute.xlu0 %727
    %v731 = vsel %vm143, %v650, 0
    %733 = vmatprep.subr.mxu0 0.0
    %734 = vmatpush1.msra.mxu0 0.0
    %735 = vmatprep.subr.mxu0 0.0
    %736 = vmatpush1.msra.mxu0 0.0
    %737 = vmatprep.subr.mxu0 0.0
    %738 = vmatpush1.msra.mxu0 0.0
    %739 = vmatprep.subr.mxu0 0.0
    %740 = vmatpush1.msra.mxu0 0.0
    %741 = vmatprep.subr.mxu0 0.0
    %742 = vmatpush1.msra.mxu0 0.0
    %743 = vmatprep.subr.mxu0 0.0
    %744 = vmatpush1.msra.mxu0 0.0
    %745 = vmatprep.subr.mxu0 0.0
    %746 = vmatpush1.msra.mxu0 0.0
    %747 = vmatprep.subr.mxu0 0.0
    %748 = vmatpush1.msra.mxu0 0.0
    %749 = vmatprep.subr.mxu0 0.0
    %750 = vmatpush1.msra.mxu0 0.0
    %751 = vmatprep.subr.mxu0 0.0
    %752 = vmatpush1.msra.mxu0 0.0
    %753 = vmatprep.subr.mxu0 0.0
    %754 = vmatpush1.msra.mxu0 0.0
    %755 = vmatprep.subr.mxu0 0.0
    %756 = vmatpush1.msra.mxu0 0.0
    %757 = vmatprep.subr.mxu0 0.0
    %758 = vmatpush1.msra.mxu0 0.0
    %759 = vmatprep.subr.mxu0 0.0
    %760 = vmatpush1.msra.mxu0 0.0
    %761 = vmatprep.subr.mxu0 0.0
    %762 = vmatpush1.msra.mxu0 0.0
    %763 = vmatprep.subr.mxu0 0.0
    %764 = vmatpush1.msra.mxu0 %v728
    %765 = vmatprep.subr.mxu0 0.0
    %766 = vmatpush2.msra.mxu0 0.0
    %767 = vmatprep.subr.mxu0 0.0
    %768 = vmatpush2.msra.mxu0 0.0
    %769 = vmatprep.subr.mxu0 0.0
    %770 = vmatpush2.msra.mxu0 0.0
    %771 = vmatprep.subr.mxu0 0.0
    %772 = vmatpush2.msra.mxu0 0.0
    %773 = vmatprep.subr.mxu0 0.0
    %774 = vmatpush2.msra.mxu0 0.0
    %775 = vmatprep.subr.mxu0 0.0
    %776 = vmatpush2.msra.mxu0 0.0
    %777 = vmatprep.subr.mxu0 0.0
    %778 = vmatpush2.msra.mxu0 0.0
    %779 = vmatprep.subr.mxu0 0.0
    %780 = vmatpush2.msra.mxu0 0.0
    %781 = vmatprep.subr.mxu0 0.0
    %782 = vmatpush2.msra.mxu0 0.0
    %783 = vmatprep.subr.mxu0 0.0
    %784 = vmatpush2.msra.mxu0 0.0
    %785 = vmatprep.subr.mxu0 0.0
    %786 = vmatpush2.msra.mxu0 0.0
    %787 = vmatprep.subr.mxu0 0.0
    %788 = vmatpush2.msra.mxu0 0.0
    %789 = vmatprep.subr.mxu0 0.0
    %790 = vmatpush2.msra.mxu0 0.0
    %791 = vmatprep.subr.mxu0 0.0
    %792 = vmatpush2.msra.mxu0 0.0
    %793 = vmatprep.subr.mxu0 0.0
    %794 = vmatpush2.msra.mxu0 0.0
    %795 = vmatprep.subr.mxu0 0.0
    %796 = vmatpush2.msra.mxu0 0.0
    %797 = vmatprep.mubr.f32.mxu0 0.0
    %798 = vmatmul.mubr.f32.gmra.mxu0 %v731
    %v799 = vpop.f32.mrf.mxu0
    %v800 = vadd.f32 0.0, %v799
    %v801 = vpop.f32.mrf.mxu0
    %802 = vdwg.mxu0
    %803 = vrot.lane.b32.xlu0 %v132, 112
    %v804 = vpop.permute.xlu0 %803
    %805 = vrot.lane.b32.xlu0 %v132, 80
    %v806 = vpop.permute.xlu0 %805
    %v807 = vsel %vm143, %v804, 0
    %v809 = vsel %vm143, %v806, 0
    %811 = vmatprep.subr.mxu0 0.0
    %812 = vmatpush1.xpose.msra.mxu0 0.0
    %813 = vmatprep.subr.mxu0 0.0
    %814 = vmatpush1.xpose.msra.mxu0 0.0
    %815 = vmatprep.subr.mxu0 0.0
    %816 = vmatpush1.xpose.msra.mxu0 0.0
    %817 = vmatprep.subr.mxu0 0.0
    %818 = vmatpush1.xpose.msra.mxu0 0.0
    %819 = vmatprep.subr.mxu0 0.0
    %820 = vmatpush1.xpose.msra.mxu0 0.0
    %821 = vmatprep.subr.mxu0 0.0
    %822 = vmatpush1.xpose.msra.mxu0 0.0
    %823 = vmatprep.subr.mxu0 0.0
    %824 = vmatpush1.xpose.msra.mxu0 0.0
    %825 = vmatprep.subr.mxu0 0.0
    %826 = vmatpush1.xpose.msra.mxu0 0.0
    %827 = vmatprep.subr.mxu0 0.0
    %828 = vmatpush1.xpose.msra.mxu0 0.0
    %829 = vmatprep.subr.mxu0 0.0
    %830 = vmatpush1.xpose.msra.mxu0 0.0
    %831 = vmatprep.subr.mxu0 0.0
    %832 = vmatpush1.xpose.msra.mxu0 0.0
    %833 = vmatprep.subr.mxu0 0.0
    %834 = vmatpush1.xpose.msra.mxu0 0.0
    %835 = vmatprep.subr.mxu0 0.0
    %836 = vmatpush1.xpose.msra.mxu0 0.0
    %837 = vmatprep.subr.mxu0 0.0
    %838 = vmatpush1.xpose.msra.mxu0 0.0
    %839 = vmatprep.subr.mxu0 0.0
    %840 = vmatpush1.xpose.msra.mxu0 0.0
    %841 = vmatprep.subr.mxu0 0.0
    %842 = vmatpush1.xpose.msra.mxu0 %v809
    %843 = vmatprep.subr.mxu0 0.0
    %844 = vmatpush2.xpose.msra.mxu0 0.0
    %845 = vmatprep.subr.mxu0 0.0
    %846 = vmatpush2.xpose.msra.mxu0 0.0
    %847 = vmatprep.subr.mxu0 0.0
    %848 = vmatpush2.xpose.msra.mxu0 0.0
    %849 = vmatprep.subr.mxu0 0.0
    %850 = vmatpush2.xpose.msra.mxu0 0.0
    %851 = vmatprep.subr.mxu0 0.0
    %852 = vmatpush2.xpose.msra.mxu0 0.0
    %853 = vmatprep.subr.mxu0 0.0
    %854 = vmatpush2.xpose.msra.mxu0 0.0
    %855 = vmatprep.subr.mxu0 0.0
    %856 = vmatpush2.xpose.msra.mxu0 0.0
    %857 = vmatprep.subr.mxu0 0.0
    %858 = vmatpush2.xpose.msra.mxu0 0.0
    %859 = vmatprep.subr.mxu0 0.0
    %860 = vmatpush2.xpose.msra.mxu0 0.0
    %861 = vmatprep.subr.mxu0 0.0
    %862 = vmatpush2.xpose.msra.mxu0 0.0
    %863 = vmatprep.subr.mxu0 0.0
    %864 = vmatpush2.xpose.msra.mxu0 0.0
    %865 = vmatprep.subr.mxu0 0.0
    %866 = vmatpush2.xpose.msra.mxu0 0.0
    %867 = vmatprep.subr.mxu0 0.0
    %868 = vmatpush2.xpose.msra.mxu0 0.0
    %869 = vmatprep.subr.mxu0 0.0
    %870 = vmatpush2.xpose.msra.mxu0 0.0
    %871 = vmatprep.subr.mxu0 0.0
    %872 = vmatpush2.xpose.msra.mxu0 0.0
    %873 = vmatprep.subr.mxu0 0.0
    %874 = vmatpush2.xpose.msra.mxu0 0.0
    %875 = vmatprep.mubr.f32.mxu0 0.0
    %876 = vmatmul.mubr.f32.gmra.mxu0 %v807
    %v877 = vpop.f32.mrf.mxu0
    %v878 = vadd.f32 0.0, %v877
    %v879 = vpop.f32.mrf.mxu0
    %880 = vdwg.mxu0
    %881 = vrot.lane.b32.xlu0 %v137, 112
    %v882 = vpop.permute.xlu0 %881
    %883 = vrot.lane.b32.xlu0 %v137, 80
    %v884 = vpop.permute.xlu0 %883
    %v885 = vsel %vm143, %v882, 0
    %v887 = vsel %vm143, %v884, 0
    %889 = vmatprep.subr.mxu0 0.0
    %890 = vmatpush1.xpose.msra.mxu0 0.0
    %891 = vmatprep.subr.mxu0 0.0
    %892 = vmatpush1.xpose.msra.mxu0 0.0
    %893 = vmatprep.subr.mxu0 0.0
    %894 = vmatpush1.xpose.msra.mxu0 0.0
    %895 = vmatprep.subr.mxu0 0.0
    %896 = vmatpush1.xpose.msra.mxu0 0.0
    %897 = vmatprep.subr.mxu0 0.0
    %898 = vmatpush1.xpose.msra.mxu0 0.0
    %899 = vmatprep.subr.mxu0 0.0
    %900 = vmatpush1.xpose.msra.mxu0 0.0
    %901 = vmatprep.subr.mxu0 0.0
    %902 = vmatpush1.xpose.msra.mxu0 0.0
    %903 = vmatprep.subr.mxu0 0.0
    %904 = vmatpush1.xpose.msra.mxu0 0.0
    %905 = vmatprep.subr.mxu0 0.0
    %906 = vmatpush1.xpose.msra.mxu0 0.0
    %907 = vmatprep.subr.mxu0 0.0
    %908 = vmatpush1.xpose.msra.mxu0 0.0
    %909 = vmatprep.subr.mxu0 0.0
    %910 = vmatpush1.xpose.msra.mxu0 0.0
    %911 = vmatprep.subr.mxu0 0.0
    %912 = vmatpush1.xpose.msra.mxu0 0.0
    %913 = vmatprep.subr.mxu0 0.0
    %914 = vmatpush1.xpose.msra.mxu0 0.0
    %915 = vmatprep.subr.mxu0 0.0
    %916 = vmatpush1.xpose.msra.mxu0 0.0
    %917 = vmatprep.subr.mxu0 0.0
    %918 = vmatpush1.xpose.msra.mxu0 0.0
    %919 = vmatprep.subr.mxu0 0.0
    %920 = vmatpush1.xpose.msra.mxu0 %v887
    %921 = vmatprep.subr.mxu0 0.0
    %922 = vmatpush2.xpose.msra.mxu0 0.0
    %923 = vmatprep.subr.mxu0 0.0
    %924 = vmatpush2.xpose.msra.mxu0 0.0
    %925 = vmatprep.subr.mxu0 0.0
    %926 = vmatpush2.xpose.msra.mxu0 0.0
    %927 = vmatprep.subr.mxu0 0.0
    %928 = vmatpush2.xpose.msra.mxu0 0.0
    %929 = vmatprep.subr.mxu0 0.0
    %930 = vmatpush2.xpose.msra.mxu0 0.0
    %931 = vmatprep.subr.mxu0 0.0
    %932 = vmatpush2.xpose.msra.mxu0 0.0
    %933 = vmatprep.subr.mxu0 0.0
    %934 = vmatpush2.xpose.msra.mxu0 0.0
    %935 = vmatprep.subr.mxu0 0.0
    %936 = vmatpush2.xpose.msra.mxu0 0.0
    %937 = vmatprep.subr.mxu0 0.0
    %938 = vmatpush2.xpose.msra.mxu0 0.0
    %939 = vmatprep.subr.mxu0 0.0
    %940 = vmatpush2.xpose.msra.mxu0 0.0
    %941 = vmatprep.subr.mxu0 0.0
    %942 = vmatpush2.xpose.msra.mxu0 0.0
    %943 = vmatprep.subr.mxu0 0.0
    %944 = vmatpush2.xpose.msra.mxu0 0.0
    %945 = vmatprep.subr.mxu0 0.0
    %946 = vmatpush2.xpose.msra.mxu0 0.0
    %947 = vmatprep.subr.mxu0 0.0
    %948 = vmatpush2.xpose.msra.mxu0 0.0
    %949 = vmatprep.subr.mxu0 0.0
    %950 = vmatpush2.xpose.msra.mxu0 0.0
    %951 = vmatprep.subr.mxu0 0.0
    %952 = vmatpush2.xpose.msra.mxu0 0.0
    %953 = vmatprep.mubr.f32.mxu0 0.0
    %954 = vmatmul.mubr.f32.gmra.mxu0 %v885
    %v955 = vpop.f32.mrf.mxu0
    %v956 = vadd.f32 0.0, %v955
    %v957 = vpop.f32.mrf.mxu0
    %958 = vdwg.mxu0
    %v959 = vmul.f32 %v878, 0.35355338
    %v960 = vmul.f32 %v956, 0.35355338
    %v961 = vsel %vm143, %v959, -inf
    %962 = vmax.xlane.f32.xlu0 %v961
    %v963 = vpop.xlane.xlu0 %962
    %v964 = vsel %vm143, %v960, -inf
    %965 = vmax.xlane.f32.xlu0 %v964
    %v966 = vpop.xlane.xlu0 %965
    %v967 = vsub.f32 %v959, %v963
    %v968 = vsub.f32 %v960, %v966
    %v969 = vmul.f32 %v967, 1.442695
    %v970 = vpow.pop %v969
    %v971 = vmul.f32 %v968, 1.442695
    %v972 = vpow.pop %v971
    %v973 = vsel %vm143, %v970, 0.0
    %974 = vadd.xlane.f32.xlu0 %v973
    %v975 = vpop.xlane.xlu0 %974
    %v976 = vsel %vm143, %v972, 0.0
    %977 = vadd.xlane.f32.xlu0 %v976
    %v978 = vpop.xlane.xlu0 %977
    %v979 = vrcp.pop %v975
    %v980 = vrcp.pop %v978
    %v981 = vmul.f32 %v970, %v979
    %v982 = vmul.f32 %v972, %v980
    %983 = vrot.lane.b32.xlu0 %v132, 48
    %v984 = vpop.permute.xlu0 %983
    %v987 = vsel %vm143, %v981, 0
    %989 = vmatprep.subr.mxu0 0.0
    %990 = vmatpush1.msra.mxu0 0.0
    %991 = vmatprep.subr.mxu0 0.0
    %992 = vmatpush1.msra.mxu0 0.0
    %993 = vmatprep.subr.mxu0 0.0
    %994 = vmatpush1.msra.mxu0 0.0
    %995 = vmatprep.subr.mxu0 0.0
    %996 = vmatpush1.msra.mxu0 0.0
    %997 = vmatprep.subr.mxu0 0.0
    %998 = vmatpush1.msra.mxu0 0.0
    %999 = vmatprep.subr.mxu0 0.0
    %1000 = vmatpush1.msra.mxu0 0.0
    %1001 = vmatprep.subr.mxu0 0.0
    %1002 = vmatpush1.msra.mxu0 0.0
    %1003 = vmatprep.subr.mxu0 0.0
    %1004 = vmatpush1.msra.mxu0 0.0
    %1005 = vmatprep.subr.mxu0 0.0
    %1006 = vmatpush1.msra.mxu0 0.0
    %1007 = vmatprep.subr.mxu0 0.0
    %1008 = vmatpush1.msra.mxu0 0.0
    %1009 = vmatprep.subr.mxu0 0.0
    %1010 = vmatpush1.msra.mxu0 0.0
    %1011 = vmatprep.subr.mxu0 0.0
    %1012 = vmatpush1.msra.mxu0 0.0
    %1013 = vmatprep.subr.mxu0 0.0
    %1014 = vmatpush1.msra.mxu0 0.0
    %1015 = vmatprep.subr.mxu0 0.0
    %1016 = vmatpush1.msra.mxu0 0.0
    %1017 = vmatprep.subr.mxu0 0.0
    %1018 = vmatpush1.msra.mxu0 0.0
    %1019 = vmatprep.subr.mxu0 0.0
    %1020 = vmatpush1.msra.mxu0 %v984
    %1021 = vmatprep.subr.mxu0 0.0
    %1022 = vmatpush2.msra.mxu0 0.0
    %1023 = vmatprep.subr.mxu0 0.0
    %1024 = vmatpush2.msra.mxu0 0.0
    %1025 = vmatprep.subr.mxu0 0.0
    %1026 = vmatpush2.msra.mxu0 0.0
    %1027 = vmatprep.subr.mxu0 0.0
    %1028 = vmatpush2.msra.mxu0 0.0
    %1029 = vmatprep.subr.mxu0 0.0
    %1030 = vmatpush2.msra.mxu0 0.0
    %1031 = vmatprep.subr.mxu0 0.0
    %1032 = vmatpush2.msra.mxu0 0.0
    %1033 = vmatprep.subr.mxu0 0.0
    %1034 = vmatpush2.msra.mxu0 0.0
    %1035 = vmatprep.subr.mxu0 0.0
    %1036 = vmatpush2.msra.mxu0 0.0
    %1037 = vmatprep.subr.mxu0 0.0
    %1038 = vmatpush2.msra.mxu0 0.0
    %1039 = vmatprep.subr.mxu0 0.0
    %1040 = vmatpush2.msra.mxu0 0.0
    %1041 = vmatprep.subr.mxu0 0.0
    %1042 = vmatpush2.msra.mxu0 0.0
    %1043 = vmatprep.subr.mxu0 0.0
    %1044 = vmatpush2.msra.mxu0 0.0
    %1045 = vmatprep.subr.mxu0 0.0
    %1046 = vmatpush2.msra.mxu0 0.0
    %1047 = vmatprep.subr.mxu0 0.0
    %1048 = vmatpush2.msra.mxu0 0.0
    %1049 = vmatprep.subr.mxu0 0.0
    %1050 = vmatpush2.msra.mxu0 0.0
    %1051 = vmatprep.subr.mxu0 0.0
    %1052 = vmatpush2.msra.mxu0 0.0
    %1053 = vmatprep.mubr.f32.mxu0 0.0
    %1054 = vmatmul.mubr.f32.gmra.mxu0 %v987
    %v1055 = vpop.f32.mrf.mxu0
    %v1056 = vadd.f32 0.0, %v1055
    %v1057 = vpop.f32.mrf.mxu0
    %1058 = vdwg.mxu0
    %1059 = vrot.lane.b32.xlu0 %v137, 48
    %v1060 = vpop.permute.xlu0 %1059
    %v1063 = vsel %vm143, %v982, 0
    %1065 = vmatprep.subr.mxu0 0.0
    %1066 = vmatpush1.msra.mxu0 0.0
    %1067 = vmatprep.subr.mxu0 0.0
    %1068 = vmatpush1.msra.mxu0 0.0
    %1069 = vmatprep.subr.mxu0 0.0
    %1070 = vmatpush1.msra.mxu0 0.0
    %1071 = vmatprep.subr.mxu0 0.0
    %1072 = vmatpush1.msra.mxu0 0.0
    %1073 = vmatprep.subr.mxu0 0.0
    %1074 = vmatpush1.msra.mxu0 0.0
    %1075 = vmatprep.subr.mxu0 0.0
    %1076 = vmatpush1.msra.mxu0 0.0
    %1077 = vmatprep.subr.mxu0 0.0
    %1078 = vmatpush1.msra.mxu0 0.0
    %1079 = vmatprep.subr.mxu0 0.0
    %1080 = vmatpush1.msra.mxu0 0.0
    %1081 = vmatprep.subr.mxu0 0.0
    %1082 = vmatpush1.msra.mxu0 0.0
    %1083 = vmatprep.subr.mxu0 0.0
    %1084 = vmatpush1.msra.mxu0 0.0
    %1085 = vmatprep.subr.mxu0 0.0
    %1086 = vmatpush1.msra.mxu0 0.0
    %1087 = vmatprep.subr.mxu0 0.0
    %1088 = vmatpush1.msra.mxu0 0.0
    %1089 = vmatprep.subr.mxu0 0.0
    %1090 = vmatpush1.msra.mxu0 0.0
    %1091 = vmatprep.subr.mxu0 0.0
    %1092 = vmatpush1.msra.mxu0 0.0
    %1093 = vmatprep.subr.mxu0 0.0
    %1094 = vmatpush1.msra.mxu0 0.0
    %1095 = vmatprep.subr.mxu0 0.0
    %1096 = vmatpush1.msra.mxu0 %v1060
    %1097 = vmatprep.subr.mxu0 0.0
    %1098 = vmatpush2.msra.mxu0 0.0
    %1099 = vmatprep.subr.mxu0 0.0
    %1100 = vmatpush2.msra.mxu0 0.0
    %1101 = vmatprep.subr.mxu0 0.0
    %1102 = vmatpush2.msra.mxu0 0.0
    %1103 = vmatprep.subr.mxu0 0.0
    %1104 = vmatpush2.msra.mxu0 0.0
    %1105 = vmatprep.subr.mxu0 0.0
    %1106 = vmatpush2.msra.mxu0 0.0
    %1107 = vmatprep.subr.mxu0 0.0
    %1108 = vmatpush2.msra.mxu0 0.0
    %1109 = vmatprep.subr.mxu0 0.0
    %1110 = vmatpush2.msra.mxu0 0.0
    %1111 = vmatprep.subr.mxu0 0.0
    %1112 = vmatpush2.msra.mxu0 0.0
    %1113 = vmatprep.subr.mxu0 0.0
    %1114 = vmatpush2.msra.mxu0 0.0
    %1115 = vmatprep.subr.mxu0 0.0
    %1116 = vmatpush2.msra.mxu0 0.0
    %1117 = vmatprep.subr.mxu0 0.0
    %1118 = vmatpush2.msra.mxu0 0.0
    %1119 = vmatprep.subr.mxu0 0.0
    %1120 = vmatpush2.msra.mxu0 0.0
    %1121 = vmatprep.subr.mxu0 0.0
    %1122 = vmatpush2.msra.mxu0 0.0
    %1123 = vmatprep.subr.mxu0 0.0
    %1124 = vmatpush2.msra.mxu0 0.0
    %1125 = vmatprep.subr.mxu0 0.0
    %1126 = vmatpush2.msra.mxu0 0.0
    %1127 = vmatprep.subr.mxu0 0.0
    %1128 = vmatpush2.msra.mxu0 0.0
    %1129 = vmatprep.mubr.f32.mxu0 0.0
    %1130 = vmatmul.mubr.f32.gmra.mxu0 %v1063
    %v1131 = vpop.f32.mrf.mxu0
    %v1132 = vadd.f32 0.0, %v1131
    %v1133 = vpop.f32.mrf.mxu0
    %1134 = vdwg.mxu0
    %1135 = vrot.lane.b32.xlu0 %v132, 104
    %v1136 = vpop.permute.xlu0 %1135
    %1137 = vrot.lane.b32.xlu0 %v132, 72
    %v1138 = vpop.permute.xlu0 %1137
    %v1139 = vsel %vm143, %v1136, 0
    %v1141 = vsel %vm143, %v1138, 0
    %1143 = vmatprep.subr.mxu0 0.0
    %1144 = vmatpush1.xpose.msra.mxu0 0.0
    %1145 = vmatprep.subr.mxu0 0.0
    %1146 = vmatpush1.xpose.msra.mxu0 0.0
    %1147 = vmatprep.subr.mxu0 0.0
    %1148 = vmatpush1.xpose.msra.mxu0 0.0
    %1149 = vmatprep.subr.mxu0 0.0
    %1150 = vmatpush1.xpose.msra.mxu0 0.0
    %1151 = vmatprep.subr.mxu0 0.0
    %1152 = vmatpush1.xpose.msra.mxu0 0.0
    %1153 = vmatprep.subr.mxu0 0.0
    %1154 = vmatpush1.xpose.msra.mxu0 0.0
    %1155 = vmatprep.subr.mxu0 0.0
    %1156 = vmatpush1.xpose.msra.mxu0 0.0
    %1157 = vmatprep.subr.mxu0 0.0
    %1158 = vmatpush1.xpose.msra.mxu0 0.0
    %1159 = vmatprep.subr.mxu0 0.0
    %1160 = vmatpush1.xpose.msra.mxu0 0.0
    %1161 = vmatprep.subr.mxu0 0.0
    %1162 = vmatpush1.xpose.msra.mxu0 0.0
    %1163 = vmatprep.subr.mxu0 0.0
    %1164 = vmatpush1.xpose.msra.mxu0 0.0
    %1165 = vmatprep.subr.mxu0 0.0
    %1166 = vmatpush1.xpose.msra.mxu0 0.0
    %1167 = vmatprep.subr.mxu0 0.0
    %1168 = vmatpush1.xpose.msra.mxu0 0.0
    %1169 = vmatprep.subr.mxu0 0.0
    %1170 = vmatpush1.xpose.msra.mxu0 0.0
    %1171 = vmatprep.subr.mxu0 0.0
    %1172 = vmatpush1.xpose.msra.mxu0 0.0
    %1173 = vmatprep.subr.mxu0 0.0
    %1174 = vmatpush1.xpose.msra.mxu0 %v1141
    %1175 = vmatprep.subr.mxu0 0.0
    %1176 = vmatpush2.xpose.msra.mxu0 0.0
    %1177 = vmatprep.subr.mxu0 0.0
    %1178 = vmatpush2.xpose.msra.mxu0 0.0
    %1179 = vmatprep.subr.mxu0 0.0
    %1180 = vmatpush2.xpose.msra.mxu0 0.0
    %1181 = vmatprep.subr.mxu0 0.0
    %1182 = vmatpush2.xpose.msra.mxu0 0.0
    %1183 = vmatprep.subr.mxu0 0.0
    %1184 = vmatpush2.xpose.msra.mxu0 0.0
    %1185 = vmatprep.subr.mxu0 0.0
    %1186 = vmatpush2.xpose.msra.mxu0 0.0
    %1187 = vmatprep.subr.mxu0 0.0
    %1188 = vmatpush2.xpose.msra.mxu0 0.0
    %1189 = vmatprep.subr.mxu0 0.0
    %1190 = vmatpush2.xpose.msra.mxu0 0.0
    %1191 = vmatprep.subr.mxu0 0.0
    %1192 = vmatpush2.xpose.msra.mxu0 0.0
    %1193 = vmatprep.subr.mxu0 0.0
    %1194 = vmatpush2.xpose.msra.mxu0 0.0
    %1195 = vmatprep.subr.mxu0 0.0
    %1196 = vmatpush2.xpose.msra.mxu0 0.0
    %1197 = vmatprep.subr.mxu0 0.0
    %1198 = vmatpush2.xpose.msra.mxu0 0.0
    %1199 = vmatprep.subr.mxu0 0.0
    %1200 = vmatpush2.xpose.msra.mxu0 0.0
    %1201 = vmatprep.subr.mxu0 0.0
    %1202 = vmatpush2.xpose.msra.mxu0 0.0
    %1203 = vmatprep.subr.mxu0 0.0
    %1204 = vmatpush2.xpose.msra.mxu0 0.0
    %1205 = vmatprep.subr.mxu0 0.0
    %1206 = vmatpush2.xpose.msra.mxu0 0.0
    %1207 = vmatprep.mubr.f32.mxu0 0.0
    %1208 = vmatmul.mubr.f32.gmra.mxu0 %v1139
    %v1209 = vpop.f32.mrf.mxu0
    %v1210 = vadd.f32 0.0, %v1209
    %v1211 = vpop.f32.mrf.mxu0
    %1212 = vdwg.mxu0
    %1213 = vrot.lane.b32.xlu0 %v137, 104
    %v1214 = vpop.permute.xlu0 %1213
    %1215 = vrot.lane.b32.xlu0 %v137, 72
    %v1216 = vpop.permute.xlu0 %1215
    %v1217 = vsel %vm143, %v1214, 0
    %v1219 = vsel %vm143, %v1216, 0
    %1221 = vmatprep.subr.mxu0 0.0
    %1222 = vmatpush1.xpose.msra.mxu0 0.0
    %1223 = vmatprep.subr.mxu0 0.0
    %1224 = vmatpush1.xpose.msra.mxu0 0.0
    %1225 = vmatprep.subr.mxu0 0.0
    %1226 = vmatpush1.xpose.msra.mxu0 0.0
    %1227 = vmatprep.subr.mxu0 0.0
    %1228 = vmatpush1.xpose.msra.mxu0 0.0
    %1229 = vmatprep.subr.mxu0 0.0
    %1230 = vmatpush1.xpose.msra.mxu0 0.0
    %1231 = vmatprep.subr.mxu0 0.0
    %1232 = vmatpush1.xpose.msra.mxu0 0.0
    %1233 = vmatprep.subr.mxu0 0.0
    %1234 = vmatpush1.xpose.msra.mxu0 0.0
    %1235 = vmatprep.subr.mxu0 0.0
    %1236 = vmatpush1.xpose.msra.mxu0 0.0
    %1237 = vmatprep.subr.mxu0 0.0
    %1238 = vmatpush1.xpose.msra.mxu0 0.0
    %1239 = vmatprep.subr.mxu0 0.0
    %1240 = vmatpush1.xpose.msra.mxu0 0.0
    %1241 = vmatprep.subr.mxu0 0.0
    %1242 = vmatpush1.xpose.msra.mxu0 0.0
    %1243 = vmatprep.subr.mxu0 0.0
    %1244 = vmatpush1.xpose.msra.mxu0 0.0
    %1245 = vmatprep.subr.mxu0 0.0
    %1246 = vmatpush1.xpose.msra.mxu0 0.0
    %1247 = vmatprep.subr.mxu0 0.0
    %1248 = vmatpush1.xpose.msra.mxu0 0.0
    %1249 = vmatprep.subr.mxu0 0.0
    %1250 = vmatpush1.xpose.msra.mxu0 0.0
    %1251 = vmatprep.subr.mxu0 0.0
    %1252 = vmatpush1.xpose.msra.mxu0 %v1219
    %1253 = vmatprep.subr.mxu0 0.0
    %1254 = vmatpush2.xpose.msra.mxu0 0.0
    %1255 = vmatprep.subr.mxu0 0.0
    %1256 = vmatpush2.xpose.msra.mxu0 0.0
    %1257 = vmatprep.subr.mxu0 0.0
    %1258 = vmatpush2.xpose.msra.mxu0 0.0
    %1259 = vmatprep.subr.mxu0 0.0
    %1260 = vmatpush2.xpose.msra.mxu0 0.0
    %1261 = vmatprep.subr.mxu0 0.0
    %1262 = vmatpush2.xpose.msra.mxu0 0.0
    %1263 = vmatprep.subr.mxu0 0.0
    %1264 = vmatpush2.xpose.msra.mxu0 0.0
    %1265 = vmatprep.subr.mxu0 0.0
    %1266 = vmatpush2.xpose.msra.mxu0 0.0
    %1267 = vmatprep.subr.mxu0 0.0
    %1268 = vmatpush2.xpose.msra.mxu0 0.0
    %1269 = vmatprep.subr.mxu0 0.0
    %1270 = vmatpush2.xpose.msra.mxu0 0.0
    %1271 = vmatprep.subr.mxu0 0.0
    %1272 = vmatpush2.xpose.msra.mxu0 0.0
    %1273 = vmatprep.subr.mxu0 0.0
    %1274 = vmatpush2.xpose.msra.mxu0 0.0
    %1275 = vmatprep.subr.mxu0 0.0
    %1276 = vmatpush2.xpose.msra.mxu0 0.0
    %1277 = vmatprep.subr.mxu0 0.0
    %1278 = vmatpush2.xpose.msra.mxu0 0.0
    %1279 = vmatprep.subr.mxu0 0.0
    %1280 = vmatpush2.xpose.msra.mxu0 0.0
    %1281 = vmatprep.subr.mxu0 0.0
    %1282 = vmatpush2.xpose.msra.mxu0 0.0
    %1283 = vmatprep.subr.mxu0 0.0
    %1284 = vmatpush2.xpose.msra.mxu0 0.0
    %1285 = vmatprep.mubr.f32.mxu0 0.0
    %1286 = vmatmul.mubr.f32.gmra.mxu0 %v1217
    %v1287 = vpop.f32.mrf.mxu0
    %v1288 = vadd.f32 0.0, %v1287
    %v1289 = vpop.f32.mrf.mxu0
    %1290 = vdwg.mxu0
    %v1291 = vmul.f32 %v1210, 0.35355338
    %v1292 = vmul.f32 %v1288, 0.35355338
    %v1293 = vsel %vm143, %v1291, -inf
    %1294 = vmax.xlane.f32.xlu0 %v1293
    %v1295 = vpop.xlane.xlu0 %1294
    %v1296 = vsel %vm143, %v1292, -inf
    %1297 = vmax.xlane.f32.xlu0 %v1296
    %v1298 = vpop.xlane.xlu0 %1297
    %v1299 = vsub.f32 %v1291, %v1295
    %v1300 = vsub.f32 %v1292, %v1298
    %v1301 = vmul.f32 %v1299, 1.442695
    %v1302 = vpow.pop %v1301
    %v1303 = vmul.f32 %v1300, 1.442695
    %v1304 = vpow.pop %v1303
    %v1305 = vsel %vm143, %v1302, 0.0
    %1306 = vadd.xlane.f32.xlu0 %v1305
    %v1307 = vpop.xlane.xlu0 %1306
    %v1308 = vsel %vm143, %v1304, 0.0
    %1309 = vadd.xlane.f32.xlu0 %v1308
    %v1310 = vpop.xlane.xlu0 %1309
    %v1311 = vrcp.pop %v1307
    %v1312 = vrcp.pop %v1310
    %v1313 = vmul.f32 %v1302, %v1311
    %v1314 = vmul.f32 %v1304, %v1312
    %1315 = vrot.lane.b32.xlu0 %v132, 40
    %v1316 = vpop.permute.xlu0 %1315
    %v1319 = vsel %vm143, %v1313, 0
    %1321 = vmatprep.subr.mxu0 0.0
    %1322 = vmatpush1.msra.mxu0 0.0
    %1323 = vmatprep.subr.mxu0 0.0
    %1324 = vmatpush1.msra.mxu0 0.0
    %1325 = vmatprep.subr.mxu0 0.0
    %1326 = vmatpush1.msra.mxu0 0.0
    %1327 = vmatprep.subr.mxu0 0.0
    %1328 = vmatpush1.msra.mxu0 0.0
    %1329 = vmatprep.subr.mxu0 0.0
    %1330 = vmatpush1.msra.mxu0 0.0
    %1331 = vmatprep.subr.mxu0 0.0
    %1332 = vmatpush1.msra.mxu0 0.0
    %1333 = vmatprep.subr.mxu0 0.0
    %1334 = vmatpush1.msra.mxu0 0.0
    %1335 = vmatprep.subr.mxu0 0.0
    %1336 = vmatpush1.msra.mxu0 0.0
    %1337 = vmatprep.subr.mxu0 0.0
    %1338 = vmatpush1.msra.mxu0 0.0
    %1339 = vmatprep.subr.mxu0 0.0
    %1340 = vmatpush1.msra.mxu0 0.0
    %1341 = vmatprep.subr.mxu0 0.0
    %1342 = vmatpush1.msra.mxu0 0.0
    %1343 = vmatprep.subr.mxu0 0.0
    %1344 = vmatpush1.msra.mxu0 0.0
    %1345 = vmatprep.subr.mxu0 0.0
    %1346 = vmatpush1.msra.mxu0 0.0
    %1347 = vmatprep.subr.mxu0 0.0
    %1348 = vmatpush1.msra.mxu0 0.0
    %1349 = vmatprep.subr.mxu0 0.0
    %1350 = vmatpush1.msra.mxu0 0.0
    %1351 = vmatprep.subr.mxu0 0.0
    %1352 = vmatpush1.msra.mxu0 %v1316
    %1353 = vmatprep.subr.mxu0 0.0
    %1354 = vmatpush2.msra.mxu0 0.0
    %1355 = vmatprep.subr.mxu0 0.0
    %1356 = vmatpush2.msra.mxu0 0.0
    %1357 = vmatprep.subr.mxu0 0.0
    %1358 = vmatpush2.msra.mxu0 0.0
    %1359 = vmatprep.subr.mxu0 0.0
    %1360 = vmatpush2.msra.mxu0 0.0
    %1361 = vmatprep.subr.mxu0 0.0
    %1362 = vmatpush2.msra.mxu0 0.0
    %1363 = vmatprep.subr.mxu0 0.0
    %1364 = vmatpush2.msra.mxu0 0.0
    %1365 = vmatprep.subr.mxu0 0.0
    %1366 = vmatpush2.msra.mxu0 0.0
    %1367 = vmatprep.subr.mxu0 0.0
    %1368 = vmatpush2.msra.mxu0 0.0
    %1369 = vmatprep.subr.mxu0 0.0
    %1370 = vmatpush2.msra.mxu0 0.0
    %1371 = vmatprep.subr.mxu0 0.0
    %1372 = vmatpush2.msra.mxu0 0.0
    %1373 = vmatprep.subr.mxu0 0.0
    %1374 = vmatpush2.msra.mxu0 0.0
    %1375 = vmatprep.subr.mxu0 0.0
    %1376 = vmatpush2.msra.mxu0 0.0
    %1377 = vmatprep.subr.mxu0 0.0
    %1378 = vmatpush2.msra.mxu0 0.0
    %1379 = vmatprep.subr.mxu0 0.0
    %1380 = vmatpush2.msra.mxu0 0.0
    %1381 = vmatprep.subr.mxu0 0.0
    %1382 = vmatpush2.msra.mxu0 0.0
    %1383 = vmatprep.subr.mxu0 0.0
    %1384 = vmatpush2.msra.mxu0 0.0
    %1385 = vmatprep.mubr.f32.mxu0 0.0
    %1386 = vmatmul.mubr.f32.gmra.mxu0 %v1319
    %v1387 = vpop.f32.mrf.mxu0
    %v1388 = vadd.f32 0.0, %v1387
    %v1389 = vpop.f32.mrf.mxu0
    %1390 = vdwg.mxu0
    %1391 = vrot.lane.b32.xlu0 %v137, 40
    %v1392 = vpop.permute.xlu0 %1391
    %v1395 = vsel %vm143, %v1314, 0
    %1397 = vmatprep.subr.mxu0 0.0
    %1398 = vmatpush1.msra.mxu0 0.0
    %1399 = vmatprep.subr.mxu0 0.0
    %1400 = vmatpush1.msra.mxu0 0.0
    %1401 = vmatprep.subr.mxu0 0.0
    %1402 = vmatpush1.msra.mxu0 0.0
    %1403 = vmatprep.subr.mxu0 0.0
    %1404 = vmatpush1.msra.mxu0 0.0
    %1405 = vmatprep.subr.mxu0 0.0
    %1406 = vmatpush1.msra.mxu0 0.0
    %1407 = vmatprep.subr.mxu0 0.0
    %1408 = vmatpush1.msra.mxu0 0.0
    %1409 = vmatprep.subr.mxu0 0.0
    %1410 = vmatpush1.msra.mxu0 0.0
    %1411 = vmatprep.subr.mxu0 0.0
    %1412 = vmatpush1.msra.mxu0 0.0
    %1413 = vmatprep.subr.mxu0 0.0
    %1414 = vmatpush1.msra.mxu0 0.0
    %1415 = vmatprep.subr.mxu0 0.0
    %1416 = vmatpush1.msra.mxu0 0.0
    %1417 = vmatprep.subr.mxu0 0.0
    %1418 = vmatpush1.msra.mxu0 0.0
    %1419 = vmatprep.subr.mxu0 0.0
    %1420 = vmatpush1.msra.mxu0 0.0
    %1421 = vmatprep.subr.mxu0 0.0
    %1422 = vmatpush1.msra.mxu0 0.0
    %1423 = vmatprep.subr.mxu0 0.0
    %1424 = vmatpush1.msra.mxu0 0.0
    %1425 = vmatprep.subr.mxu0 0.0
    %1426 = vmatpush1.msra.mxu0 0.0
    %1427 = vmatprep.subr.mxu0 0.0
    %1428 = vmatpush1.msra.mxu0 %v1392
    %1429 = vmatprep.subr.mxu0 0.0
    %1430 = vmatpush2.msra.mxu0 0.0
    %1431 = vmatprep.subr.mxu0 0.0
    %1432 = vmatpush2.msra.mxu0 0.0
    %1433 = vmatprep.subr.mxu0 0.0
    %1434 = vmatpush2.msra.mxu0 0.0
    %1435 = vmatprep.subr.mxu0 0.0
    %1436 = vmatpush2.msra.mxu0 0.0
    %1437 = vmatprep.subr.mxu0 0.0
    %1438 = vmatpush2.msra.mxu0 0.0
    %1439 = vmatprep.subr.mxu0 0.0
    %1440 = vmatpush2.msra.mxu0 0.0
    %1441 = vmatprep.subr.mxu0 0.0
    %1442 = vmatpush2.msra.mxu0 0.0
    %1443 = vmatprep.subr.mxu0 0.0
    %1444 = vmatpush2.msra.mxu0 0.0
    %1445 = vmatprep.subr.mxu0 0.0
    %1446 = vmatpush2.msra.mxu0 0.0
    %1447 = vmatprep.subr.mxu0 0.0
    %1448 = vmatpush2.msra.mxu0 0.0
    %1449 = vmatprep.subr.mxu0 0.0
    %1450 = vmatpush2.msra.mxu0 0.0
    %1451 = vmatprep.subr.mxu0 0.0
    %1452 = vmatpush2.msra.mxu0 0.0
    %1453 = vmatprep.subr.mxu0 0.0
    %1454 = vmatpush2.msra.mxu0 0.0
    %1455 = vmatprep.subr.mxu0 0.0
    %1456 = vmatpush2.msra.mxu0 0.0
    %1457 = vmatprep.subr.mxu0 0.0
    %1458 = vmatpush2.msra.mxu0 0.0
    %1459 = vmatprep.subr.mxu0 0.0
    %1460 = vmatpush2.msra.mxu0 0.0
    %1461 = vmatprep.mubr.f32.mxu0 0.0
    %1462 = vmatmul.mubr.f32.gmra.mxu0 %v1395
    %v1463 = vpop.f32.mrf.mxu0
    %v1464 = vadd.f32 0.0, %v1463
    %v1465 = vpop.f32.mrf.mxu0
    %1466 = vdwg.mxu0
    %1469 = vrot.lane.b32.xlu0 %v724, 8
    %v1470 = vpop.permute.xlu0 %1469
    %1471 = vrot.lane.b32.xlu0 %v800, 8
    %v1472 = vpop.permute.xlu0 %1471
    %1477 = vrot.lane.b32.xlu0 %v1056, 16
    %v1478 = vpop.permute.xlu0 %1477
    %1479 = vrot.lane.b32.xlu0 %v1132, 16
    %v1480 = vpop.permute.xlu0 %1479
    %1485 = vrot.lane.b32.xlu0 %v1388, 24
    %v1486 = vpop.permute.xlu0 %1485
    %1487 = vrot.lane.b32.xlu0 %v1464, 24
    %v1488 = vpop.permute.xlu0 %1487
    %v1491 = vsel %vm143, %v392, %v1470
    %v1492 = vsel %vm143, %v468, %v1472
    %vm1493 = vcmask 130048
    %v1494 = vsel %vm1493, %v1491, %v1478
    %v1495 = vsel %vm1493, %v1492, %v1480
    %vm1496 = vcmask 195584
    %v1497 = vsel %vm1496, %v1494, %v1486
    %v1498 = vsel %vm1496, %v1495, %v1488
    %v1499 = vld [vmem:[%s4] sm:$0xff]
    %v1500 = vld [vmem:[%s4 + $0x8] sm:$0xff]
    %v1501 = vld [vmem:[%s4 + $0x10] sm:$0xff]
    %v1502 = vld [vmem:[%s4 + $0x18] sm:$0xff]
    %v1503 = vlaneseq
    %v1504 = vshrl.u32 %v1503, 7
    %v1505 = vsub.s32 0, %v1504
    %v1506 = vrot.slane %v46, %v1505
    %v1508 = vsel %vm58, %v1497, 0
    %v1511 = vsel %vm58, %v1498, 0
    %1513 = vmatprep.subr.mxu0 0.0
    %1514 = vmatpush1.msra.mxu0 0.0
    %1515 = vmatprep.subr.mxu0 0.0
    %1516 = vmatpush1.msra.mxu0 0.0
    %1517 = vmatprep.subr.mxu0 0.0
    %1518 = vmatpush1.msra.mxu0 0.0
    %1519 = vmatprep.subr.mxu0 0.0
    %1520 = vmatpush1.msra.mxu0 0.0
    %1521 = vmatprep.subr.mxu0 0.0
    %1522 = vmatpush1.msra.mxu0 0.0
    %1523 = vmatprep.subr.mxu0 0.0
    %1524 = vmatpush1.msra.mxu0 0.0
    %1525 = vmatprep.subr.mxu0 0.0
    %1526 = vmatpush1.msra.mxu0 0.0
    %1527 = vmatprep.subr.mxu0 0.0
    %1528 = vmatpush1.msra.mxu0 0.0
    %1529 = vmatprep.subr.mxu0 0.0
    %1530 = vmatpush1.msra.mxu0 0.0
    %1531 = vmatprep.subr.mxu0 0.0
    %1532 = vmatpush1.msra.mxu0 0.0
    %1533 = vmatprep.subr.mxu0 0.0
    %1534 = vmatpush1.msra.mxu0 0.0
    %1535 = vmatprep.subr.mxu0 0.0
    %1536 = vmatpush1.msra.mxu0 0.0
    %1537 = vmatprep.subr.mxu0 0.0
    %1538 = vmatpush1.msra.mxu0 %v1502
    %1539 = vmatprep.subr.mxu0 0.0
    %1540 = vmatpush1.msra.mxu0 %v1501
    %1541 = vmatprep.subr.mxu0 0.0
    %1542 = vmatpush1.msra.mxu0 %v1500
    %1543 = vmatprep.subr.mxu0 0.0
    %1544 = vmatpush1.msra.mxu0 %v1499
    %1545 = vmatprep.subr.mxu0 0.0
    %1546 = vmatpush2.msra.mxu0 0.0
    %1547 = vmatprep.subr.mxu0 0.0
    %1548 = vmatpush2.msra.mxu0 0.0
    %1549 = vmatprep.subr.mxu0 0.0
    %1550 = vmatpush2.msra.mxu0 0.0
    %1551 = vmatprep.subr.mxu0 0.0
    %1552 = vmatpush2.msra.mxu0 0.0
    %1553 = vmatprep.subr.mxu0 0.0
    %1554 = vmatpush2.msra.mxu0 0.0
    %1555 = vmatprep.subr.mxu0 0.0
    %1556 = vmatpush2.msra.mxu0 0.0
    %1557 = vmatprep.subr.mxu0 0.0
    %1558 = vmatpush2.msra.mxu0 0.0
    %1559 = vmatprep.subr.mxu0 0.0
    %1560 = vmatpush2.msra.mxu0 0.0
    %1561 = vmatprep.subr.mxu0 0.0
    %1562 = vmatpush2.msra.mxu0 0.0
    %1563 = vmatprep.subr.mxu0 0.0
    %1564 = vmatpush2.msra.mxu0 0.0
    %1565 = vmatprep.subr.mxu0 0.0
    %1566 = vmatpush2.msra.mxu0 0.0
    %1567 = vmatprep.subr.mxu0 0.0
    %1568 = vmatpush2.msra.mxu0 0.0
    %1569 = vmatprep.subr.mxu0 0.0
    %1570 = vmatpush2.msra.mxu0 0.0
    %1571 = vmatprep.subr.mxu0 0.0
    %1572 = vmatpush2.msra.mxu0 0.0
    %1573 = vmatprep.subr.mxu0 0.0
    %1574 = vmatpush2.msra.mxu0 0.0
    %1575 = vmatprep.subr.mxu0 0.0
    %1576 = vmatpush2.msra.mxu0 0.0
    %1577 = vmatprep.mubr.f32.mxu0 0.0
    %1578 = vmatmul.mubr.f32.gmra.mxu0 %v1508
    %v1579 = vpop.f32.mrf.mxu0
    %v1580 = vadd.f32 %v1506, %v1579
    %v1581 = vpop.f32.mrf.mxu0
    %1582 = vmatprep.mubr.f32.mxu0 0.0
    %1583 = vmatmul.mubr.f32.gmra.mxu0 %v1511
    %v1584 = vpop.f32.mrf.mxu0
    %v1585 = vadd.f32 %v1506, %v1584
    %v1586 = vpop.f32.mrf.mxu0
    %1587 = vdwg.mxu0
    %v1588 = vadd.f32 %v44, %v1580
    %v1589 = vadd.f32 %v45, %v1585
    %v1590 = vsel %vm58, %v1588, 0.0
    %1591 = vadd.xlane.f32.xlu0 %v1590
    %v1592 = vpop.xlane.xlu0 %1591
    %v1593 = vsel %vm58, %v1589, 0.0
    %1594 = vadd.xlane.f32.xlu0 %v1593
    %v1595 = vpop.xlane.xlu0 %1594
    %v1596 = vrcp.pop 32.0
    %v1597 = vmul.f32 %v1592, %v1596
    %v1598 = vmul.f32 %v1595, %v1596
    %v1599 = vsub.f32 %v1588, %v1597
    %v1600 = vsub.f32 %v1589, %v1598
    %v1601 = vmul.f32 %v1599, %v1599
    %v1602 = vmul.f32 %v1600, %v1600
    %v1603 = vsel %vm58, %v1601, 0.0
    %1604 = vadd.xlane.f32.xlu0 %v1603
    %v1605 = vpop.xlane.xlu0 %1604
    %v1606 = vsel %vm58, %v1602, 0.0
    %1607 = vadd.xlane.f32.xlu0 %v1606
    %v1608 = vpop.xlane.xlu0 %1607
    %v1609 = vmul.f32 %v1605, %v1596
    %v1610 = vmul.f32 %v1608, %v1596
    %v1611 = vadd.f32 %v1609, 1e-05
    %v1612 = vadd.f32 %v1610, 1e-05
    %v1613 = vrsqrt.pop %v1611
    %v1614 = vrsqrt.pop %v1612
    %v1615 = vmul.f32 %v1599, %v1613
    %v1616 = vmul.f32 %v1600, %v1614
    %v1617 = vlaneseq
    %v1618 = vshrl.u32 %v1617, 7
    %v1619 = vsub.s32 1, %v1618
    %v1620 = vrot.slane %v46, %v1619
    %v1621 = vmul.f32 %v1615, %v1620
    %v1622 = vmul.f32 %v1616, %v1620
    %v1623 = vlaneseq
    %v1624 = vshrl.u32 %v1623, 7
    %v1625 = vsub.s32 2, %v1624
    %v1626 = vrot.slane %v46, %v1625
    %v1627 = vadd.f32 %v1621, %v1626
    %v1628 = vadd.f32 %v1622, %v1626
    %v1629 = vld [vmem:[%s5] sm:$0xff]
    %v1630 = vld [vmem:[%s5 + $0x8] sm:$0xff]
    %v1631 = vld [vmem:[%s5 + $0x10] sm:$0xff]
    %v1632 = vld [vmem:[%s5 + $0x18] sm:$0xff]
    %v1633 = vld [vmem:[%s6] sm:$0x1]
    %v1635 = vlaneseq
    %v1636 = vshrl.u32 %v1635, 7
    %v1637 = vsub.s32 0, %v1636
    %v1638 = vrot.slane %v1633, %v1637
    %v1641 = vsel %vm58, %v1627, 0
    %v1644 = vsel %vm58, %v1628, 0
    %1646 = vmatprep.subr.mxu0 0.0
    %1647 = vmatpush1.msra.mxu0 0.0
    %1648 = vmatprep.subr.mxu0 0.0
    %1649 = vmatpush1.msra.mxu0 0.0
    %1650 = vmatprep.subr.mxu0 0.0
    %1651 = vmatpush1.msra.mxu0 0.0
    %1652 = vmatprep.subr.mxu0 0.0
    %1653 = vmatpush1.msra.mxu0 0.0
    %1654 = vmatprep.subr.mxu0 0.0
    %1655 = vmatpush1.msra.mxu0 0.0
    %1656 = vmatprep.subr.mxu0 0.0
    %1657 = vmatpush1.msra.mxu0 0.0
    %1658 = vmatprep.subr.mxu0 0.0
    %1659 = vmatpush1.msra.mxu0 0.0
    %1660 = vmatprep.subr.mxu0 0.0
    %1661 = vmatpush1.msra.mxu0 0.0
    %1662 = vmatprep.subr.mxu0 0.0
    %1663 = vmatpush1.msra.mxu0 0.0
    %1664 = vmatprep.subr.mxu0 0.0
    %1665 = vmatpush1.msra.mxu0 0.0
    %1666 = vmatprep.subr.mxu0 0.0
    %1667 = vmatpush1.msra.mxu0 0.0
    %1668 = vmatprep.subr.mxu0 0.0
    %1669 = vmatpush1.msra.mxu0 0.0
    %1670 = vmatprep.subr.mxu0 0.0
    %1671 = vmatpush1.msra.mxu0 %v1632
    %1672 = vmatprep.subr.mxu0 0.0
    %1673 = vmatpush1.msra.mxu0 %v1631
    %1674 = vmatprep.subr.mxu0 0.0
    %1675 = vmatpush1.msra.mxu0 %v1630
    %1676 = vmatprep.subr.mxu0 0.0
    %1677 = vmatpush1.msra.mxu0 %v1629
    %1678 = vmatprep.subr.mxu0 0.0
    %1679 = vmatpush2.msra.mxu0 0.0
    %1680 = vmatprep.subr.mxu0 0.0
    %1681 = vmatpush2.msra.mxu0 0.0
    %1682 = vmatprep.subr.mxu0 0.0
    %1683 = vmatpush2.msra.mxu0 0.0
    %1684 = vmatprep.subr.mxu0 0.0
    %1685 = vmatpush2.msra.mxu0 0.0
    %1686 = vmatprep.subr.mxu0 0.0
    %1687 = vmatpush2.msra.mxu0 0.0
    %1688 = vmatprep.subr.mxu0 0.0
    %1689 = vmatpush2.msra.mxu0 0.0
    %1690 = vmatprep.subr.mxu0 0.0
    %1691 = vmatpush2.msra.mxu0 0.0
    %1692 = vmatprep.subr.mxu0 0.0
    %1693 = vmatpush2.msra.mxu0 0.0
    %1694 = vmatprep.subr.mxu0 0.0
    %1695 = vmatpush2.msra.mxu0 0.0
    %1696 = vmatprep.subr.mxu0 0.0
    %1697 = vmatpush2.msra.mxu0 0.0
    %1698 = vmatprep.subr.mxu0 0.0
    %1699 = vmatpush2.msra.mxu0 0.0
    %1700 = vmatprep.subr.mxu0 0.0
    %1701 = vmatpush2.msra.mxu0 0.0
    %1702 = vmatprep.subr.mxu0 0.0
    %1703 = vmatpush2.msra.mxu0 0.0
    %1704 = vmatprep.subr.mxu0 0.0
    %1705 = vmatpush2.msra.mxu0 0.0
    %1706 = vmatprep.subr.mxu0 0.0
    %1707 = vmatpush2.msra.mxu0 0.0
    %1708 = vmatprep.subr.mxu0 0.0
    %1709 = vmatpush2.msra.mxu0 0.0
    %1710 = vmatprep.mubr.f32.mxu0 0.0
    %1711 = vmatmul.mubr.f32.gmra.mxu0 %v1641
    %v1712 = vpop.f32.mrf.mxu0
    %v1713 = vadd.f32 %v1638, %v1712
    %v1714 = vpop.f32.mrf.mxu0
    %1715 = vmatprep.mubr.f32.mxu0 0.0
    %1716 = vmatmul.mubr.f32.gmra.mxu0 %v1644
    %v1717 = vpop.f32.mrf.mxu0
    %v1718 = vadd.f32 %v1638, %v1717
    %v1719 = vpop.f32.mrf.mxu0
    %1720 = vdwg.mxu0
    %v1721 = vmax.f32 %v1713, 0.0
    %v1722 = vmax.f32 %v1718, 0.0
    %v1723 = vld [vmem:[%s7] sm:$0xff]
    %v1724 = vld [vmem:[%s7 + $0x8] sm:$0xff]
    %v1725 = vld [vmem:[%s7 + $0x10] sm:$0xff]
    %v1726 = vld [vmem:[%s7 + $0x18] sm:$0xff]
    %v1727 = vld [vmem:[%s7 + $0x20] sm:$0xff]
    %v1728 = vld [vmem:[%s7 + $0x28] sm:$0xff]
    %v1729 = vld [vmem:[%s7 + $0x30] sm:$0xff]
    %v1730 = vld [vmem:[%s7 + $0x38] sm:$0xff]
    %v1731 = vld [vmem:[%s7 + $0x40] sm:$0xff]
    %v1732 = vld [vmem:[%s7 + $0x48] sm:$0xff]
    %v1733 = vld [vmem:[%s7 + $0x50] sm:$0xff]
    %v1734 = vld [vmem:[%s7 + $0x58] sm:$0xff]
    %v1735 = vld [vmem:[%s7 + $0x60] sm:$0xff]
    %v1736 = vld [vmem:[%s7 + $0x68] sm:$0xff]
    %v1737 = vld [vmem:[%s7 + $0x70] sm:$0xff]
    %v1738 = vld [vmem:[%s7 + $0x78] sm:$0xff]
    %v1739 = vlaneseq
    %v1740 = vshrl.u32 %v1739, 7
    %v1741 = vsub.s32 3, %v1740
    %v1742 = vrot.slane %v46, %v1741
    %1743 = vmatprep.subr.mxu0 0.0
    %1744 = vmatpush1.msra.mxu0 %v1738
    %1745 = vmatprep.subr.mxu0 0.0
    %1746 = vmatpush1.msra.mxu0 %v1737
    %1747 = vmatprep.subr.mxu0 0.0
    %1748 = vmatpush1.msra.mxu0 %v1736
    %1749 = vmatprep.subr.mxu0 0.0
    %1750 = vmatpush1.msra.mxu0 %v1735
    %1751 = vmatprep.subr.mxu0 0.0
    %1752 = vmatpush1.msra.mxu0 %v1734
    %1753 = vmatprep.subr.mxu0 0.0
    %1754 = vmatpush1.msra.mxu0 %v1733
    %1755 = vmatprep.subr.mxu0 0.0
    %1756 = vmatpush1.msra.mxu0 %v1732
    %1757 = vmatprep.subr.mxu0 0.0
    %1758 = vmatpush1.msra.mxu0 %v1731
    %1759 = vmatprep.subr.mxu0 0.0
    %1760 = vmatpush1.msra.mxu0 %v1730
    %1761 = vmatprep.subr.mxu0 0.0
    %1762 = vmatpush1.msra.mxu0 %v1729
    %1763 = vmatprep.subr.mxu0 0.0
    %1764 = vmatpush1.msra.mxu0 %v1728
    %1765 = vmatprep.subr.mxu0 0.0
    %1766 = vmatpush1.msra.mxu0 %v1727
    %1767 = vmatprep.subr.mxu0 0.0
    %1768 = vmatpush1.msra.mxu0 %v1726
    %1769 = vmatprep.subr.mxu0 0.0
    %1770 = vmatpush1.msra.mxu0 %v1725
    %1771 = vmatprep.subr.mxu0 0.0
    %1772 = vmatpush1.msra.mxu0 %v1724
    %1773 = vmatprep.subr.mxu0 0.0
    %1774 = vmatpush1.msra.mxu0 %v1723
    %1775 = vmatprep.subr.mxu0 0.0
    %1776 = vmatpush2.msra.mxu0 0.0
    %1777 = vmatprep.subr.mxu0 0.0
    %1778 = vmatpush2.msra.mxu0 0.0
    %1779 = vmatprep.subr.mxu0 0.0
    %1780 = vmatpush2.msra.mxu0 0.0
    %1781 = vmatprep.subr.mxu0 0.0
    %1782 = vmatpush2.msra.mxu0 0.0
    %1783 = vmatprep.subr.mxu0 0.0
    %1784 = vmatpush2.msra.mxu0 0.0
    %1785 = vmatprep.subr.mxu0 0.0
    %1786 = vmatpush2.msra.mxu0 0.0
    %1787 = vmatprep.subr.mxu0 0.0
    %1788 = vmatpush2.msra.mxu0 0.0
    %1789 = vmatprep.subr.mxu0 0.0
    %1790 = vmatpush2.msra.mxu0 0.0
    %1791 = vmatprep.subr.mxu0 0.0
    %1792 = vmatpush2.msra.mxu0 0.0
    %1793 = vmatprep.subr.mxu0 0.0
    %1794 = vmatpush2.msra.mxu0 0.0
    %1795 = vmatprep.subr.mxu0 0.0
    %1796 = vmatpush2.msra.mxu0 0.0
    %1797 = vmatprep.subr.mxu0 0.0
    %1798 = vmatpush2.msra.mxu0 0.0
    %1799 = vmatprep.subr.mxu0 0.0
    %1800 = vmatpush2.msra.mxu0 0.0
    %1801 = vmatprep.subr.mxu0 0.0
    %1802 = vmatpush2.msra.mxu0 0.0
    %1803 = vmatprep.subr.mxu0 0.0
    %1804 = vmatpush2.msra.mxu0 0.0
    %1805 = vmatprep.subr.mxu0 0.0
    %1806 = vmatpush2.msra.mxu0 0.0
    %1807 = vmatprep.mubr.f32.mxu0 0.0
    %1808 = vmatmul.mubr.f32.gmra.mxu0 %v1721
    %v1809 = vpop.f32.mrf.mxu0
    %v1810 = vadd.f32 %v1742, %v1809
    %v1811 = vpop.f32.mrf.mxu0
    %1812 = vmatprep.mubr.f32.mxu0 0.0
    %1813 = vmatmul.mubr.f32.gmra.mxu0 %v1722
    %v1814 = vpop.f32.mrf.mxu0
    %v1815 = vadd.f32 %v1742, %v1814
    %v1816 = vpop.f32.mrf.mxu0
    %1817 = vdwg.mxu0
    %v1818 = vadd.f32 %v1627, %v1810
    %v1819 = vadd.f32 %v1628, %v1815
    %v1820 = vsel %vm58, %v1818, 0.0
    %1821 = vadd.xlane.f32.xlu0 %v1820
    %v1822 = vpop.xlane.xlu0 %1821
    %v1823 = vsel %vm58, %v1819, 0.0
    %1824 = vadd.xlane.f32.xlu0 %v1823
    %v1825 = vpop.xlane.xlu0 %1824
    %v1826 = vmul.f32 %v1822, %v1596
    %v1827 = vmul.f32 %v1825, %v1596
    %v1828 = vsub.f32 %v1818, %v1826
    %v1829 = vsub.f32 %v1819, %v1827
    %v1830 = vmul.f32 %v1828, %v1828
    %v1831 = vmul.f32 %v1829, %v1829
    %v1832 = vsel %vm58, %v1830, 0.0
    %1833 = vadd.xlane.f32.xlu0 %v1832
    %v1834 = vpop.xlane.xlu0 %1833
    %v1835 = vsel %vm58, %v1831, 0.0
    %1836 = vadd.xlane.f32.xlu0 %v1835
    %v1837 = vpop.xlane.xlu0 %1836
    %v1838 = vmul.f32 %v1834, %v1596
    %v1839 = vmul.f32 %v1837, %v1596
    %v1840 = vadd.f32 %v1838, 1e-05
    %v1841 = vadd.f32 %v1839, 1e-05
    %v1842 = vrsqrt.pop %v1840
    %v1843 = vrsqrt.pop %v1841
    %v1844 = vmul.f32 %v1828, %v1842
    %v1845 = vmul.f32 %v1829, %v1843
    %v1846 = vlaneseq
    %v1847 = vshrl.u32 %v1846, 7
    %v1848 = vsub.s32 4, %v1847
    %v1849 = vrot.slane %v46, %v1848
    %v1850 = vmul.f32 %v1844, %v1849
    %v1851 = vmul.f32 %v1845, %v1849
    %v1852 = vlaneseq
    %v1853 = vshrl.u32 %v1852, 7
    %v1854 = vsub.s32 5, %v1853
    %v1855 = vrot.slane %v46, %v1854
    %v1856 = vadd.f32 %v1850, %v1855
    %v1857 = vadd.f32 %v1851, %v1855
    %v1858 = vadd.f32 %v44, %v1856
    %v1859 = vadd.f32 %v45, %v1857
    %v1862 = vrot.slane %v1859, 7
    %vm1863 = vcmask 1041409
    %v1864 = vsel %vm1863, %v1862, %v1858
    %v1866 = vrot.slane %v1858, 1
    %v1867 = vsel %vm1863, %v1859, %v1866
    %1868 = vrot.lane.b32.xlu0 %v1867, 32
    %v1869 = vpop.permute.xlu0 %1868
    %v1871 = vrot.slane %v1858, 2
    %v1872 = vrot.slane %v1859, 1
    %v1873 = vsel %vm1863, %v1872, %v1871
    %1874 = vrot.lane.b32.xlu0 %v1873, 64
    %v1875 = vpop.permute.xlu0 %1874
    %v1877 = vrot.slane %v1858, 3
    %v1878 = vrot.slane %v1859, 2
    %v1879 = vsel %vm1863, %v1878, %v1877
    %1880 = vrot.lane.b32.xlu0 %v1879, 96
    %v1881 = vpop.permute.xlu0 %1880
    %v1883 = vrot.slane %v1858, 4
    %v1884 = vrot.slane %v1859, 3
    %v1885 = vsel %vm1863, %v1884, %v1883
    %v1887 = vrot.slane %v1858, 5
    %v1888 = vrot.slane %v1859, 4
    %v1889 = vsel %vm1863, %v1888, %v1887
    %1890 = vrot.lane.b32.xlu0 %v1889, 32
    %v1891 = vpop.permute.xlu0 %1890
    %v1893 = vrot.slane %v1858, 6
    %v1894 = vrot.slane %v1859, 5
    %v1895 = vsel %vm1863, %v1894, %v1893
    %1896 = vrot.lane.b32.xlu0 %v1895, 64
    %v1897 = vpop.permute.xlu0 %1896
    %v1899 = vrot.slane %v1858, 7
    %v1900 = vrot.slane %v1859, 6
    %v1901 = vsel %vm1863, %v1900, %v1899
    %1902 = vrot.lane.b32.xlu0 %v1901, 96
    %v1903 = vpop.permute.xlu0 %1902
    %v1905 = vsel %vm58, %v1864, %v1869
    %vm1906 = vcmask 523264
    %v1907 = vsel %vm1906, %v1905, %v1875
    %vm1908 = vcmask 785408
    %v1909 = vsel %vm1908, %v1907, %v1881
    %v1910 = vsel %vm58, %v1885, %v1891
    %v1911 = vsel %vm1906, %v1910, %v1897
    %v1912 = vsel %vm1908, %v1911, %v1903
    %v1915 = vcombine.low %v1909, %v1912
    %v1917 = vunpack.c.l.s4 1983009808
    %v1918 = vunpack.c.0.s8 %v1917
    %v1919 = vlaneseq
    %v1920 = vshrl.u32 %v1919, 7
    %v1921 = vsub.s32 %v1918, %v1920
    %v1922 = vrot.slane %v1915, %v1921
    %1924 = vst [vmem:[#allocation2] sm:$0xf] %v1922
    // Predicated region
    $region38: #{tpu_custom_call.1} parent=1 // pred_check
      _
    $region39: #{tpu_custom_call.1} parent=1 // pred_check_branch
      %1926 = sbr.rel (0) target = $region41
    $region40: #{tpu_custom_call.1} parent=1 // pred_region
      %s1928 = ssub.s32 64, 64
      %1929 = vsyncadd [#allocation3], %s1928
      %s1931 = sshll.u32 [#allocation2], 4
      %s1932 = int_to_ptr.vmem [resolvable:$true] %s1931
      %1934 = dma.vmem_to_hbm [thread:$0]  %s1932, 64, %s9, [#allocation3]
    $region41: #{tpu_custom_call.1} parent=1 // pred_fallthru
      _
    // Predicated region
    $region42: #{tpu_custom_call.1} parent=1 // pred_check
      _
    $region43: #{tpu_custom_call.1} parent=1 // pred_check_branch
      %1936 = sbr.rel (0) target = $region45
    $region44: #{tpu_custom_call.1} parent=1 // pred_region
      %1937 = dma.done [#allocation3], 64
    $region45: #{tpu_custom_call.1} parent=1 // pred_fallthru
      _
    %1938 = vsyncpa [#allocation3], 1

</llo_original>
